<compile_context>
chip_gen: v7x
topology: tpu7x:2x2x1
jax: 0.10.0
libtpu: 0.0.40
codegen_flags: <defaults>
</compile_context>

<pallas_src>
import functools

import jax
import jax.numpy as jnp
from jax.experimental import pallas as pl
from jax.experimental.pallas import tpu as pltpu


NEG_SLOPE = 0.2      # GATConv LeakyReLU slope
MASK_NEG = 1e30      # additive mask bias magnitude
BN_EPS = 1e-5


# ----------------------------------------------------------------------------
# Fused per-layer kernel: skip Linear + all etype GATConvs + folded BN + ELU
# ----------------------------------------------------------------------------
def _rgat_layer_kernel(x_ref, skipw_ref, wext_ref, mask_ref, scale_ref, shift_ref,
                       o_ref, acc_ref, *, n_dst, hid, heads):
    """One grid step handles one edge type; the grid axis is a reduction.

    x_ref:     (n_src, din)            node features (resident across etypes)
    skipw_ref: (din, hid)              skip Linear weight (bias folded into shift)
    wext_ref:  (1, din, hid + 2*heads) this etype's [W_fc | W@a_l | W@a_r]
    mask_ref:  (1, n_dst, n_src) int8  this etype's dense adjacency (1 = edge)
    scale/shift: (1, hid)              folded BatchNorm (+ all biases)
    o_ref:     (n_dst, hid)            layer output (written on the last etype)
    acc_ref:   (n_dst, hid) f32 VMEM   x_skip accumulator
    """
    j = pl.program_id(0)
    fh = hid // heads

    # ---- init: skip connection on the dst prefix (biases live in `shift`)
    @pl.when(j == 0)
    def _init():
        acc_ref[...] = jnp.dot(x_ref[:n_dst, :], skipw_ref[...],
                               preferred_element_type=jnp.float32)

    # ---- single lane-dense MXU projection: [feat_src | el | er]
    z = jnp.dot(x_ref[...], wext_ref[0], preferred_element_type=jnp.float32)
    feat = z[:, :hid]                                    # (n_src, hid)
    el_t = z[:, hid:hid + heads].T                       # (heads, n_src)
    er_t = z[:n_dst, hid + heads:hid + 2 * heads].T      # (heads, n_dst)

    # ---- attention logits with additive mask bias (0 for edge, -1e30 otherwise)
    e = er_t[:, :, None] + el_t[:, None, :]              # (heads, n_dst, n_src)
    e = jnp.where(e > 0.0, e, NEG_SLOPE * e)             # LeakyReLU(0.2)
    mbias = (mask_ref[0].astype(jnp.float32) - 1.0) * MASK_NEG
    e = e + mbias[None, :, :]

    # ---- masked softmax over incoming edges (zero in-degree -> all-zero alpha)
    mx = jnp.max(e, axis=-1, keepdims=True)
    mx = jnp.where(mx < -MASK_NEG * 0.1, 0.0, mx)        # guard all-masked rows
    p = jnp.exp(e - mx)                                  # masked entries underflow to 0
    denom = jnp.sum(p, axis=-1, keepdims=True) + 1e-20
    alpha = (p * pl.reciprocal(denom, approx=True)).astype(jnp.bfloat16)

    # ---- aggregation: per-head MXU matmuls, bf16 operands, f32 accumulate
    feat_b = feat.astype(jnp.bfloat16)
    contrib = jnp.concatenate(
        [jnp.dot(alpha[h], feat_b[:, h * fh:(h + 1) * fh],
                 preferred_element_type=jnp.float32)
         for h in range(heads)],
        axis=-1)                                         # (n_dst, hid)
    acc_ref[...] += contrib

    # ---- finalize: folded BatchNorm scale/shift + ELU epilogue
    @pl.when(j == pl.num_programs(0) - 1)
    def _fin():
        y = acc_ref[...] * scale_ref[...] + shift_ref[...]
        o_ref[...] = jnp.where(y > 0.0, y, jnp.exp(jnp.minimum(y, 0.0)) - 1.0)


def rgat_layer(x, layer_p, mask_i8, n_dst, num_heads):
    n_src, din = x.shape
    w_ext = layer_p["w_ext"]          # (E, din, hid + 2*heads)
    skip_w = layer_p["skip_w"]        # (din, hid)
    scale = layer_p["scale"]          # (1, hid)
    shift = layer_p["shift"]          # (1, hid)
    n_et, _, wcols = w_ext.shape
    hid = skip_w.shape[1]
    assert n_dst <= n_src, "dst nodes must be a prefix of src nodes (DGL block)"

    kernel = functools.partial(_rgat_layer_kernel,
                               n_dst=n_dst, hid=hid, heads=num_heads)
    return pl.pallas_call(
        kernel,
        grid=(n_et,),
        in_specs=[
            pl.BlockSpec((n_src, din), lambda j: (0, 0)),           # x (resident)
            pl.BlockSpec((din, hid), lambda j: (0, 0)),             # skip weight
            pl.BlockSpec((1, din, wcols), lambda j: (j, 0, 0)),     # per-etype weights
            pl.BlockSpec((1, n_dst, n_src), lambda j: (j, 0, 0)),   # per-etype adjacency
            pl.BlockSpec((1, hid), lambda j: (0, 0)),               # folded BN scale
            pl.BlockSpec((1, hid), lambda j: (0, 0)),               # folded BN shift
        ],
        out_specs=pl.BlockSpec((n_dst, hid), lambda j: (0, 0)),
        out_shape=jax.ShapeDtypeStruct((n_dst, hid), jnp.float32),
        scratch_shapes=[pltpu.VMEM((n_dst, hid), jnp.float32)],
        compiler_params=pltpu.CompilerParams(dimension_semantics=("arbitrary",)),
    )(x, skip_w, w_ext, mask_i8, scale, shift)


# ----------------------------------------------------------------------------
# Fused MLP head: Linear -> folded BN -> ReLU -> Linear
# ----------------------------------------------------------------------------
def _mlp_kernel(x_ref, w1_ref, scale_ref, shift_ref, w2_ref, b2_ref, o_ref):
    h = jnp.dot(x_ref[...], w1_ref[...], preferred_element_type=jnp.float32)
    h = jnp.maximum(h * scale_ref[...] + shift_ref[...], 0.0)
    o_ref[...] = (jnp.dot(h, w2_ref[...], preferred_element_type=jnp.float32)
                  + b2_ref[...])


def mlp_head(x, mlp_p):
    n = x.shape[0]
    out_c = mlp_p["w2"].shape[1]
    args = (x, mlp_p["w1"], mlp_p["scale"], mlp_p["shift"], mlp_p["w2"], mlp_p["b2"])
    return pl.pallas_call(
        _mlp_kernel,
        grid=(1,),
        in_specs=[pl.BlockSpec(a.shape, lambda i: (0, 0)) for a in args],
        out_specs=pl.BlockSpec((n, out_c), lambda i: (0, 0)),
        out_shape=jax.ShapeDtypeStruct((n, out_c), jnp.float32),
    )(*args)


# ----------------------------------------------------------------------------
# Parameters (deterministic synthetic init, mirrors the PyTorch module) + folding
# ----------------------------------------------------------------------------
def init_params(key, in_c, out_c, hid, n_etypes, n_layers, n_heads):
    f_head = hid // n_heads
    k = [key]

    def nk():
        k[0], sub = jax.random.split(k[0])
        return sub

    def bn():
        return {
            "gamma": 1.0 + 0.1 * jax.random.normal(nk(), (hid,), jnp.float32),
            "beta": 0.1 * jax.random.normal(nk(), (hid,), jnp.float32),
            "mean": 0.1 * jax.random.normal(nk(), (hid,), jnp.float32),
            "var": 1.0 + 0.1 * jax.random.uniform(nk(), (hid,), jnp.float32),
        }

    params = {"layers": []}
    for i in range(n_layers):
        din = in_c if i == 0 else hid
        layer = {
            "skip_w": 0.1 * jax.random.normal(nk(), (din, hid), jnp.float32),
            "skip_b": 0.1 * jax.random.normal(nk(), (hid,), jnp.float32),
            "bn": bn(),
            "convs": [],
        }
        for _ in range(n_etypes):
            layer["convs"].append({
                "fc_w": 0.1 * jax.random.normal(nk(), (din, hid), jnp.float32),
                "attn_l": 0.1 * jax.random.normal(nk(), (n_heads, f_head), jnp.float32),
                "attn_r": 0.1 * jax.random.normal(nk(), (n_heads, f_head), jnp.float32),
                "bias": 0.1 * jax.random.normal(nk(), (hid,), jnp.float32),
            })
        params["layers"].append(layer)

    params["mlp"] = {
        "w1": 0.1 * jax.random.normal(nk(), (hid, hid), jnp.float32),
        "b1": 0.1 * jax.random.normal(nk(), (hid,), jnp.float32),
        "bn": bn(),
        "w2": 0.1 * jax.random.normal(nk(), (hid, out_c), jnp.float32),
        "b2": 0.1 * jax.random.normal(nk(), (out_c,), jnp.float32),
    }
    return params


def fold_params(params, n_heads):
    """One-time weight transformation for the fused kernels:
    - per etype: concatenate [W_fc | W_fc@a_l | W_fc@a_r] (el/er from the same matmul)
    - fold BatchNorm + skip bias + all GATConv biases into per-channel scale/shift.
    """
    folded = {"layers": []}
    for lp in params["layers"]:
        hid = lp["skip_w"].shape[1]
        fh = hid // n_heads
        w_ext, total_bias = [], lp["skip_b"]
        for cp in lp["convs"]:
            fc = cp["fc_w"]                                      # (din, hid)
            fc_r = fc.reshape(fc.shape[0], n_heads, fh)          # (din, H, F)
            w_al = jnp.einsum("dhf,hf->dh", fc_r, cp["attn_l"])  # (din, H)
            w_ar = jnp.einsum("dhf,hf->dh", fc_r, cp["attn_r"])  # (din, H)
            w_ext.append(jnp.concatenate([fc, w_al, w_ar], axis=1))
            total_bias = total_bias + cp["bias"]
        bn = lp["bn"]
        scale = bn["gamma"] * jax.lax.rsqrt(bn["var"] + BN_EPS)
        shift = bn["beta"] - bn["mean"] * scale + scale * total_bias
        folded["layers"].append({
            "skip_w": lp["skip_w"],
            "w_ext": jnp.stack(w_ext, axis=0),                   # (E, din, hid + 2H)
            "scale": scale.reshape(1, hid),
            "shift": shift.reshape(1, hid),
        })

    mp = params["mlp"]
    bn = mp["bn"]
    hid = mp["w1"].shape[1]
    scale = bn["gamma"] * jax.lax.rsqrt(bn["var"] + BN_EPS)
    shift = bn["beta"] - bn["mean"] * scale + scale * mp["b1"]
    folded["mlp"] = {
        "w1": mp["w1"],
        "scale": scale.reshape(1, hid),
        "shift": shift.reshape(1, hid),
        "w2": mp["w2"],
        "b2": mp["b2"].reshape(1, -1),
    }
    return folded


def rgat_forward(folded, mfgs, x, num_heads):
    for i, mfg in enumerate(mfgs):
        x = rgat_layer(x, folded["layers"][i], mfg["masks_i8"], mfg["n_dst"], num_heads)
        # dropout: identity (eval mode)
    return mlp_head(x, folded["mlp"])


# ----------------------------------------------------------------------------
if __name__ == "__main__":
    in_channels, out_channels, hidden_channels = 16, 8, 32
    num_etypes, num_layers, num_heads = 3, 2, 4
    n_src = [48, 24]   # source nodes per MFG layer
    n_dst = [24, 8]    # destination nodes per MFG layer (dst == next layer's src)

    key = jax.random.PRNGKey(0)
    kp, kx, kg = jax.random.split(key, 3)

    params = init_params(kp, in_channels, out_channels, hidden_channels,
                         num_etypes, num_layers, num_heads)
    folded = fold_params(params, num_heads)
    x = jax.random.normal(kx, (n_src[0], in_channels), jnp.float32)

    mfgs = []
    for i in range(num_layers):
        kg, sub = jax.random.split(kg)
        masks = (jax.random.uniform(sub, (num_etypes, n_dst[i], n_src[i])) < 0.3)
        mfgs.append({"n_src": n_src[i], "n_dst": n_dst[i],
                     "masks_i8": masks.astype(jnp.int8)})

    out = rgat_forward(folded, mfgs, x, num_heads)
    out = jax.block_until_ready(out)
    assert out.shape == (n_dst[-1], out_channels)
    assert bool(jnp.all(jnp.isfinite(out)))
    print("KERNEL_OK")
</pallas_src>

<mosaic_0001>
module attributes {stable_mosaic.version = 11 : i64} {
  func.func @_rgat_layer_kernel(%arg0: i32, %arg1: memref<48x16xf32, #tpu.memory_space<vmem>>, %arg2: memref<16x32xf32, #tpu.memory_space<vmem>>, %arg3: memref<1x16x40xf32, #tpu.memory_space<vmem>>, %arg4: memref<1x24x48xi8, #tpu.memory_space<vmem>>, %arg5: memref<1x32xf32, #tpu.memory_space<vmem>>, %arg6: memref<1x32xf32, #tpu.memory_space<vmem>>, %arg7: memref<24x32xf32, #tpu.memory_space<vmem>>, %arg8: memref<24x32xf32, #tpu.memory_space<vmem>>) attributes {dimension_semantics = [#tpu.dimension_semantics<arbitrary>], iteration_bounds = array<i64: 3>, scalar_prefetch = 0 : i64, scratch_operands = 1 : i64, tpu.core_type = #tpu.core_type<tc>, window_params = [{pipeline_mode = #tpu.pipeline_mode<synchronous>, transform_indices = @transform_0, window_bounds = array<i64: 48, 16>}, {pipeline_mode = #tpu.pipeline_mode<synchronous>, transform_indices = @transform_1, window_bounds = array<i64: 16, 32>}, {transform_indices = @transform_2, window_bounds = array<i64: 1, 16, 40>}, {transform_indices = @transform_3, window_bounds = array<i64: 1, 24, 48>}, {pipeline_mode = #tpu.pipeline_mode<synchronous>, transform_indices = @transform_4, window_bounds = array<i64: 1, 32>}, {pipeline_mode = #tpu.pipeline_mode<synchronous>, transform_indices = @transform_5, window_bounds = array<i64: 1, 32>}, {pipeline_mode = #tpu.pipeline_mode<synchronous>, transform_indices = @transform_6, window_bounds = array<i64: 24, 32>}]} {
    %c0_i32 = arith.constant 0 : i32
    %0 = arith.cmpi eq, %arg0, %c0_i32 : i32
    %1 = arith.extui %0 : i1 to i32
    %c0_i32_0 = arith.constant 0 : i32
    %2 = arith.cmpi ne, %1, %c0_i32_0 : i32
    scf.if %2 {
      %c0_26 = arith.constant 0 : index
      %c0_27 = arith.constant 0 : index
      %73 = vector.load %arg1[%c0_26, %c0_27] : memref<48x16xf32, #tpu.memory_space<vmem>>, vector<24x16xf32>
      %c0_28 = arith.constant 0 : index
      %c0_29 = arith.constant 0 : index
      %74 = vector.load %arg2[%c0_28, %c0_29] : memref<16x32xf32, #tpu.memory_space<vmem>>, vector<16x32xf32>
      %cst_30 = arith.constant dense<0.000000e+00> : vector<24x32xf32>
      %75 = tpu.matmul %73, %74, %cst_30 {dimension_numbers = #tpu.dot_dimension_numbers<[1], [0], [0], [1], [0, 0, 1, 1], [], []>} : vector<24x16xf32>, vector<16x32xf32>, vector<24x32xf32> -> vector<24x32xf32>
      %c0_31 = arith.constant 0 : index
      %c0_32 = arith.constant 0 : index
      %76 = vector.load %arg8[%c0_31, %c0_32] : memref<24x32xf32, #tpu.memory_space<vmem>>, vector<24x32xf32>
      tpu.vector_store %arg8[%c0_31, %c0_32], %75 {strides = array<i32>} : memref<24x32xf32, #tpu.memory_space<vmem>>, vector<24x32xf32>,
    } else {
    }
    %c0 = arith.constant 0 : index
    %c0_1 = arith.constant 0 : index
    %3 = vector.load %arg1[%c0, %c0_1] : memref<48x16xf32, #tpu.memory_space<vmem>>, vector<48x16xf32>
    %c0_2 = arith.constant 0 : index
    %c0_3 = arith.constant 0 : index
    %c0_4 = arith.constant 0 : index
    %4 = vector.load %arg3[%c0_2, %c0_3, %c0_4] : memref<1x16x40xf32, #tpu.memory_space<vmem>>, vector<1x16x40xf32>
    %5 = vector.shape_cast %4 : vector<1x16x40xf32> to vector<16x40xf32>
    %cst = arith.constant dense<0.000000e+00> : vector<48x40xf32>
    %6 = tpu.matmul %3, %5, %cst {dimension_numbers = #tpu.dot_dimension_numbers<[1], [0], [0], [1], [0, 0, 1, 1], [], []>} : vector<48x16xf32>, vector<16x40xf32>, vector<48x40xf32> -> vector<48x40xf32>
    %7 = vector.extract_strided_slice %6 {offsets = [0, 0], sizes = [48, 32], strides = [1, 1]} : vector<48x40xf32> to vector<48x32xf32>
    %8 = vector.extract_strided_slice %6 {offsets = [0, 32], sizes = [48, 4], strides = [1, 1]} : vector<48x40xf32> to vector<48x4xf32>
    %9 = tpu.transpose %8, [1, 0] : vector<48x4xf32> -> vector<4x48xf32>
    %10 = vector.extract_strided_slice %6 {offsets = [0, 36], sizes = [24, 4], strides = [1, 1]} : vector<48x40xf32> to vector<24x4xf32>
    %11 = tpu.transpose %10, [1, 0] : vector<24x4xf32> -> vector<4x24xf32>
    %12 = vector.shape_cast %11 : vector<4x24xf32> to vector<4x24x1xf32>
    %13 = vector.shape_cast %9 : vector<4x48xf32> to vector<4x1x48xf32>
    %14 = vector.broadcast %12 : vector<4x24x1xf32> to vector<4x24x48xf32>
    %15 = vector.broadcast %13 : vector<4x1x48xf32> to vector<4x24x48xf32>
    %16 = arith.addf %14, %15 : vector<4x24x48xf32>
    %cst_5 = arith.constant 0.000000e+00 : f32
    %17 = vector.broadcast %cst_5 : f32 to vector<4x24x48xf32>
    %18 = arith.cmpf ogt, %16, %17 : vector<4x24x48xf32>
    %cst_6 = arith.constant 2.000000e-01 : f32
    %19 = vector.broadcast %cst_6 : f32 to vector<4x24x48xf32>
    %20 = arith.mulf %19, %16 : vector<4x24x48xf32>
    %21 = arith.select %18, %16, %20 : vector<4x24x48xi1>, vector<4x24x48xf32>
    %c0_7 = arith.constant 0 : index
    %c0_8 = arith.constant 0 : index
    %c0_9 = arith.constant 0 : index
    %22 = vector.load %arg4[%c0_7, %c0_8, %c0_9] : memref<1x24x48xi8, #tpu.memory_space<vmem>>, vector<1x24x48xi8>
    %23 = vector.shape_cast %22 : vector<1x24x48xi8> to vector<24x48xi8>
    %24 = arith.sitofp %23 : vector<24x48xi8> to vector<24x48xf32>
    %cst_10 = arith.constant 1.000000e+00 : f32
    %25 = vector.broadcast %cst_10 : f32 to vector<24x48xf32>
    %26 = arith.subf %24, %25 : vector<24x48xf32>
    %cst_11 = arith.constant 1.000000e+30 : f32
    %27 = vector.broadcast %cst_11 : f32 to vector<24x48xf32>
    %28 = arith.mulf %26, %27 : vector<24x48xf32>
    %29 = vector.shape_cast %28 : vector<24x48xf32> to vector<1x24x48xf32>
    %30 = vector.broadcast %29 : vector<1x24x48xf32> to vector<4x24x48xf32>
    %31 = arith.addf %21, %30 : vector<4x24x48xf32>
    %cst_12 = arith.constant dense<0xFF800000> : vector<4x24xf32>
    %32 = vector.multi_reduction <maximumf>, %31, %cst_12 [2] : vector<4x24x48xf32> to vector<4x24xf32>
    %33 = vector.shape_cast %32 : vector<4x24xf32> to vector<4x24x1xf32>
    %cst_13 = arith.constant -1.000000e+29 : f32
    %34 = vector.broadcast %cst_13 : f32 to vector<4x24x1xf32>
    %35 = arith.cmpf olt, %33, %34 : vector<4x24x1xf32>
    %cst_14 = arith.constant 0.000000e+00 : f32
    %36 = vector.broadcast %cst_14 : f32 to vector<4x24x1xf32>
    %37 = arith.select %35, %36, %33 : vector<4x24x1xi1>, vector<4x24x1xf32>
    %38 = vector.broadcast %37 : vector<4x24x1xf32> to vector<4x24x48xf32>
    %39 = arith.subf %31, %38 : vector<4x24x48xf32>
    %40 = math.exp %39 : vector<4x24x48xf32>
    %cst_15 = arith.constant dense<0.000000e+00> : vector<4x24xf32>
    %41 = vector.multi_reduction <add>, %40, %cst_15 [2] : vector<4x24x48xf32> to vector<4x24xf32>
    %42 = vector.shape_cast %41 : vector<4x24xf32> to vector<4x24x1xf32>
    %cst_16 = arith.constant 9.99999968E-21 : f32
    %43 = vector.broadcast %cst_16 : f32 to vector<4x24x1xf32>
    %44 = arith.addf %42, %43 : vector<4x24x1xf32>
    %45 = tpu.reciprocal %44 {approx = true} : vector<4x24x1xf32> -> vector<4x24x1xf32>
    %46 = vector.broadcast %45 : vector<4x24x1xf32> to vector<4x24x48xf32>
    %47 = arith.mulf %40, %46 : vector<4x24x48xf32>
    %48 = arith.truncf %47 : vector<4x24x48xf32> to vector<4x24x48xbf16>
    %49 = arith.truncf %7 : vector<48x32xf32> to vector<48x32xbf16>
    %50 = vector.extract_strided_slice %48 {offsets = [0, 0, 0], sizes = [1, 24, 48], strides = [1, 1, 1]} : vector<4x24x48xbf16> to vector<1x24x48xbf16>
    %51 = vector.shape_cast %50 : vector<1x24x48xbf16> to vector<24x48xbf16>
    %52 = vector.extract_strided_slice %49 {offsets = [0, 0], sizes = [48, 8], strides = [1, 1]} : vector<48x32xbf16> to vector<48x8xbf16>
    %cst_17 = arith.constant dense<0.000000e+00> : vector<24x8xf32>
    %53 = tpu.matmul %51, %52, %cst_17 {dimension_numbers = #tpu.dot_dimension_numbers<[1], [0], [0], [1], [0, 0, 1, 1], [], []>} : vector<24x48xbf16>, vector<48x8xbf16>, vector<24x8xf32> -> vector<24x8xf32>
    %54 = vector.extract_strided_slice %48 {offsets = [1, 0, 0], sizes = [1, 24, 48], strides = [1, 1, 1]} : vector<4x24x48xbf16> to vector<1x24x48xbf16>
    %55 = vector.shape_cast %54 : vector<1x24x48xbf16> to vector<24x48xbf16>
    %56 = vector.extract_strided_slice %49 {offsets = [0, 8], sizes = [48, 8], strides = [1, 1]} : vector<48x32xbf16> to vector<48x8xbf16>
    %cst_18 = arith.constant dense<0.000000e+00> : vector<24x8xf32>
    %57 = tpu.matmul %55, %56, %cst_18 {dimension_numbers = #tpu.dot_dimension_numbers<[1], [0], [0], [1], [0, 0, 1, 1], [], []>} : vector<24x48xbf16>, vector<48x8xbf16>, vector<24x8xf32> -> vector<24x8xf32>
    %58 = vector.extract_strided_slice %48 {offsets = [2, 0, 0], sizes = [1, 24, 48], strides = [1, 1, 1]} : vector<4x24x48xbf16> to vector<1x24x48xbf16>
    %59 = vector.shape_cast %58 : vector<1x24x48xbf16> to vector<24x48xbf16>
    %60 = vector.extract_strided_slice %49 {offsets = [0, 16], sizes = [48, 8], strides = [1, 1]} : vector<48x32xbf16> to vector<48x8xbf16>
    %cst_19 = arith.constant dense<0.000000e+00> : vector<24x8xf32>
    %61 = tpu.matmul %59, %60, %cst_19 {dimension_numbers = #tpu.dot_dimension_numbers<[1], [0], [0], [1], [0, 0, 1, 1], [], []>} : vector<24x48xbf16>, vector<48x8xbf16>, vector<24x8xf32> -> vector<24x8xf32>
    %62 = vector.extract_strided_slice %48 {offsets = [3, 0, 0], sizes = [1, 24, 48], strides = [1, 1, 1]} : vector<4x24x48xbf16> to vector<1x24x48xbf16>
    %63 = vector.shape_cast %62 : vector<1x24x48xbf16> to vector<24x48xbf16>
    %64 = vector.extract_strided_slice %49 {offsets = [0, 24], sizes = [48, 8], strides = [1, 1]} : vector<48x32xbf16> to vector<48x8xbf16>
    %cst_20 = arith.constant dense<0.000000e+00> : vector<24x8xf32>
    %65 = tpu.matmul %63, %64, %cst_20 {dimension_numbers = #tpu.dot_dimension_numbers<[1], [0], [0], [1], [0, 0, 1, 1], [], []>} : vector<24x48xbf16>, vector<48x8xbf16>, vector<24x8xf32> -> vector<24x8xf32>
    %66 = tpu.concatenate %53, %57, %61, %65 in 1 : vector<24x8xf32>, vector<24x8xf32>, vector<24x8xf32>, vector<24x8xf32> -> vector<24x32xf32>
    %c0_21 = arith.constant 0 : index
    %c0_22 = arith.constant 0 : index
    %67 = vector.load %arg8[%c0_21, %c0_22] : memref<24x32xf32, #tpu.memory_space<vmem>>, vector<24x32xf32>
    %68 = arith.addf %67, %66 : vector<24x32xf32>
    %c0_23 = arith.constant 0 : index
    %c0_24 = arith.constant 0 : index
    %69 = vector.load %arg8[%c0_23, %c0_24] : memref<24x32xf32, #tpu.memory_space<vmem>>, vector<24x32xf32>
    tpu.vector_store %arg8[%c0_23, %c0_24], %68 {strides = array<i32>} : memref<24x32xf32, #tpu.memory_space<vmem>>, vector<24x32xf32>,
    %c2_i32 = arith.constant 2 : i32
    %70 = arith.cmpi eq, %arg0, %c2_i32 : i32
    %71 = arith.extui %70 : i1 to i32
    %c0_i32_25 = arith.constant 0 : i32
    %72 = arith.cmpi ne, %71, %c0_i32_25 : i32
    scf.if %72 {
      %c0_26 = arith.constant 0 : index
      %c0_27 = arith.constant 0 : index
      %73 = vector.load %arg8[%c0_26, %c0_27] : memref<24x32xf32, #tpu.memory_space<vmem>>, vector<24x32xf32>
      %c0_28 = arith.constant 0 : index
      %c0_29 = arith.constant 0 : index
      %74 = vector.load %arg5[%c0_28, %c0_29] : memref<1x32xf32, #tpu.memory_space<vmem>>, vector<1x32xf32>
      %75 = vector.broadcast %74 : vector<1x32xf32> to vector<24x32xf32>
      %76 = arith.mulf %73, %75 : vector<24x32xf32>
      %c0_30 = arith.constant 0 : index
      %c0_31 = arith.constant 0 : index
      %77 = vector.load %arg6[%c0_30, %c0_31] : memref<1x32xf32, #tpu.memory_space<vmem>>, vector<1x32xf32>
      %78 = vector.broadcast %77 : vector<1x32xf32> to vector<24x32xf32>
      %79 = arith.addf %76, %78 : vector<24x32xf32>
      %cst_32 = arith.constant 0.000000e+00 : f32
      %80 = vector.broadcast %cst_32 : f32 to vector<24x32xf32>
      %81 = arith.cmpf ogt, %79, %80 : vector<24x32xf32>
      %cst_33 = arith.constant 0.000000e+00 : f32
      %82 = vector.broadcast %cst_33 : f32 to vector<24x32xf32>
      %83 = arith.minimumf %79, %82 : vector<24x32xf32>
      %84 = math.exp %83 : vector<24x32xf32>
      %cst_34 = arith.constant 1.000000e+00 : f32
      %85 = vector.broadcast %cst_34 : f32 to vector<24x32xf32>
      %86 = arith.subf %84, %85 : vector<24x32xf32>
      %87 = arith.select %81, %79, %86 : vector<24x32xi1>, vector<24x32xf32>
      %c0_35 = arith.constant 0 : index
      %c0_36 = arith.constant 0 : index
      %88 = vector.load %arg7[%c0_35, %c0_36] : memref<24x32xf32, #tpu.memory_space<vmem>>, vector<24x32xf32>
      tpu.vector_store %arg7[%c0_35, %c0_36], %87 {strides = array<i32>} : memref<24x32xf32, #tpu.memory_space<vmem>>, vector<24x32xf32>,
    } else {
    }
    return
  }
  func.func @transform_0(%arg0: i32) -> (i32, i32) {
    %c0_i32 = arith.constant 0 : i32
    %c0_i32_0 = arith.constant 0 : i32
    %c0_i32_1 = arith.constant 0 : i32
    return %c0_i32, %c0_i32_0 : i32, i32
  }
  func.func @transform_1(%arg0: i32) -> (i32, i32) {
    %c0_i32 = arith.constant 0 : i32
    %c0_i32_0 = arith.constant 0 : i32
    %c0_i32_1 = arith.constant 0 : i32
    return %c0_i32, %c0_i32_0 : i32, i32
  }
  func.func @transform_2(%arg0: i32) -> (i32, i32, i32) {
    %c0_i32 = arith.constant 0 : i32
    %c0_i32_0 = arith.constant 0 : i32
    %c0_i32_1 = arith.constant 0 : i32
    return %arg0, %c0_i32, %c0_i32_0 : i32, i32, i32
  }
  func.func @transform_3(%arg0: i32) -> (i32, i32, i32) {
    %c0_i32 = arith.constant 0 : i32
    %c0_i32_0 = arith.constant 0 : i32
    %c0_i32_1 = arith.constant 0 : i32
    return %arg0, %c0_i32, %c0_i32_0 : i32, i32, i32
  }
  func.func @transform_4(%arg0: i32) -> (i32, i32) {
    %c0_i32 = arith.constant 0 : i32
    %c0_i32_0 = arith.constant 0 : i32
    %c0_i32_1 = arith.constant 0 : i32
    return %c0_i32, %c0_i32_0 : i32, i32
  }
  func.func @transform_5(%arg0: i32) -> (i32, i32) {
    %c0_i32 = arith.constant 0 : i32
    %c0_i32_0 = arith.constant 0 : i32
    %c0_i32_1 = arith.constant 0 : i32
    return %c0_i32, %c0_i32_0 : i32, i32
  }
  func.func @transform_6(%arg0: i32) -> (i32, i32) {
    %c0_i32 = arith.constant 0 : i32
    %c0_i32_0 = arith.constant 0 : i32
    %c0_i32_1 = arith.constant 0 : i32
    return %c0_i32, %c0_i32_0 : i32, i32
  }
}

</mosaic_0001>

<llo_original>
// kernel: tpu_custom_call.1
$region0: #{tpu_custom_call.1}
  #allocation0 [shape = 'u32[]', space=smem, size = 0x4, offset = 0x4, fixed_abs, tag = 'smem constant byte address 0x4 - core index']
  #allocation1 [shape = 'u32[144,128]{1,0:T(1,128)}', space=vmem, size = 0x12000, scoped, tag = 'internal scratch']
  #allocation2 [shape = 'f32[24,32]{1,0:T(8,128)}', space=vmem, size = 0x3000, scoped, tag = 'scratch operand']
  %s0 = inlined_call_operand.vmem [shape: f32[48,16], index: 0, kind: input, shape index: {}]
  %s1 = inlined_call_operand.hbm [shape: f32[16,32], index: 1, kind: input, shape index: {}]
  %s2 = inlined_call_operand.vmem [shape: f32[3,16,40], index: 2, kind: input, shape index: {}]
  %s3 = inlined_call_operand.vmem [shape: s8[3,24,48], index: 3, kind: input, shape index: {}]
  %s4 = inlined_call_operand.vmem [shape: f32[1,32], index: 4, kind: input, shape index: {}]
  %s5 = inlined_call_operand.vmem [shape: f32[1,32], index: 5, kind: input, shape index: {}]
  %s6 = inlined_call_operand.hbm [shape: f32[24,32], index: 6, kind: output, shape index: {}]
  %s7 = sld [smem:[#allocation0]]
  $region69: #{tpu_custom_call.1} parent=0
    _
  %s9 = ssub.s32 1, %s7
  %s10 = scalar_select 0, %s9, %s7
  $region1: #{tpu_custom_call.1} parent=0
    #allocation3 [shape = 'u8[8192]{0}', space=vmem, size = 0x2000, scoped, tag = 'input window, operand 1, single buffered']
    #allocation4 [shape = 's32[2]{0}', space=sflag, size = 0x8, scoped, tag = 'scoped memory for tpu_custom_call.1']
    #allocation5 [shape = 's32[2]{0}', space=sflag, size = 0x8, scoped, tag = 'scoped memory for tpu_custom_call.1']
    #allocation6 [shape = 'u8[12288]{0}', space=vmem, size = 0x3000, scoped, tag = 'output window, operand 0, single buffered']
    %11 = vsyncpa [#allocation4], 0
    %12 = vsyncpa [#allocation5], 0
    loop: start=0, step=1, limit=5
    $region2: #{tpu_custom_call.1} parent=1 // loop_pre_header
      _
    $region3: #{tpu_custom_call.1} parent=1 // loop_header
      %s14 = sphi 0, %s18
      %p15 = scmp.ge.s32.totalorder %s14, 5
      %s22 = sphi 0, %s22
      %s24 = sphi 0, %s22
      %s25 = sphi 0, %s24
      %s39 = sphi 0, %s25
      %s43 = sphi 0, %s43
      %s45 = sphi 0, %s43
      %s46 = sphi 0, %s45
      %s60 = sphi 0, %s46
      %s66 = sphi 0, %s68
      %s69 = sphi 0, %s66
      %s70 = sphi 0, %s69
      %s86 = sphi 0, %s70
      %s92 = sphi 0, %s94
      %s95 = sphi 0, %s92
      %s96 = sphi 0, %s95
      %s112 = sphi 0, %s96
      %s116 = sphi 0, %s116
      %s118 = sphi 0, %s116
      %s119 = sphi 0, %s118
      %s133 = sphi 0, %s119
      %s137 = sphi 0, %s137
      %s139 = sphi 0, %s137
      %s140 = sphi 0, %s139
      %s154 = sphi 0, %s140
      %s158 = sphi 0, %s158
      %s160 = sphi 0, %s158
      %s161 = sphi 0, %s160
      %s175 = sphi 0, %s161
    $region4: #{tpu_custom_call.1} parent=1 // loop_header_branch
      %17 = sbr.rel (%p15) target = $region8
    $region5: #{tpu_custom_call.1} parent=1 // loop_body
      %s19 = ssub.s32 %s14, 1
      %s20 = ssub.s32 %s14, 2
      %s21 = sadd.s32 %s14, 1
      %s23 = sadd.s32 %s22, 1
      %p26 = scmp.eq.s32.totalorder %s14, 2
      %p27 = scmp.ne.s32.totalorder %s22, %s24
      %p28 = scmp.eq.s32.totalorder %s14, 0
      %p29 = por %p27, %p28
      %p30 = scmp.ne.s32.totalorder %s22, %s24
      %p31 = scmp.eq.s32.totalorder %s19, 2
      %p32 = por %p30, %p31
      %p33 = scmp.ne.s32.totalorder %s24, %s25
      %p34 = scmp.eq.s32.totalorder %s19, 0
      %p35 = por %p33, %p34
      %p36 = scmp.ne.s32.totalorder %s24, %s25
      %p37 = scmp.eq.s32.totalorder %s20, 2
      %p38 = por %p36, %p37
      %p40 = scmp.ne.s32.totalorder %s25, %s39
      %p41 = scmp.eq.s32.totalorder %s20, 0
      %p42 = por %p40, %p41
      %s44 = sadd.s32 %s43, 1
      %p47 = scmp.eq.s32.totalorder %s14, 2
      %p48 = scmp.ne.s32.totalorder %s43, %s45
      %p49 = scmp.eq.s32.totalorder %s14, 0
      %p50 = por %p48, %p49
      %p51 = scmp.ne.s32.totalorder %s43, %s45
      %p52 = scmp.eq.s32.totalorder %s19, 2
      %p53 = por %p51, %p52
      %p54 = scmp.ne.s32.totalorder %s45, %s46
      %p55 = scmp.eq.s32.totalorder %s19, 0
      %p56 = por %p54, %p55
      %p57 = scmp.ne.s32.totalorder %s45, %s46
      %p58 = scmp.eq.s32.totalorder %s20, 2
      %p59 = por %p57, %p58
      %p61 = scmp.ne.s32.totalorder %s46, %s60
      %p62 = scmp.eq.s32.totalorder %s20, 0
      %p63 = por %p61, %p62
      %s64 = ssub.s32 %s14, %s21
      %p65 = scmp.eq.s32.totalorder %s64, 0
      %s67 = sadd.s32 %s66, 1
      %s68 = scalar_select %p65, %s66, %s67
      %p71 = pneg %p65
      %p72 = scmp.eq.s32.totalorder %s14, 2
      %p73 = por %p71, %p72
      %p74 = scmp.ne.s32.totalorder %s66, %s69
      %p75 = scmp.eq.s32.totalorder %s14, 0
      %p76 = por %p74, %p75
      %p77 = scmp.ne.s32.totalorder %s66, %s69
      %p78 = scmp.eq.s32.totalorder %s19, 2
      %p79 = por %p77, %p78
      %p80 = scmp.ne.s32.totalorder %s69, %s70
      %p81 = scmp.eq.s32.totalorder %s19, 0
      %p82 = por %p80, %p81
      %p83 = scmp.ne.s32.totalorder %s69, %s70
      %p84 = scmp.eq.s32.totalorder %s20, 2
      %p85 = por %p83, %p84
      %p87 = scmp.ne.s32.totalorder %s70, %s86
      %p88 = scmp.eq.s32.totalorder %s20, 0
      %p89 = por %p87, %p88
      %s90 = ssub.s32 %s14, %s21
      %p91 = scmp.eq.s32.totalorder %s90, 0
      %s93 = sadd.s32 %s92, 1
      %s94 = scalar_select %p91, %s92, %s93
      %p97 = pneg %p91
      %p98 = scmp.eq.s32.totalorder %s14, 2
      %p99 = por %p97, %p98
      %p100 = scmp.ne.s32.totalorder %s92, %s95
      %p101 = scmp.eq.s32.totalorder %s14, 0
      %p102 = por %p100, %p101
      %p103 = scmp.ne.s32.totalorder %s92, %s95
      %p104 = scmp.eq.s32.totalorder %s19, 2
      %p105 = por %p103, %p104
      %p106 = scmp.ne.s32.totalorder %s95, %s96
      %p107 = scmp.eq.s32.totalorder %s19, 0
      %p108 = por %p106, %p107
      %p109 = scmp.ne.s32.totalorder %s95, %s96
      %p110 = scmp.eq.s32.totalorder %s20, 2
      %p111 = por %p109, %p110
      %p113 = scmp.ne.s32.totalorder %s96, %s112
      %p114 = scmp.eq.s32.totalorder %s20, 0
      %p115 = por %p113, %p114
      %s117 = sadd.s32 %s116, 1
      %p120 = scmp.eq.s32.totalorder %s14, 2
      %p121 = scmp.ne.s32.totalorder %s116, %s118
      %p122 = scmp.eq.s32.totalorder %s14, 0
      %p123 = por %p121, %p122
      %p124 = scmp.ne.s32.totalorder %s116, %s118
      %p125 = scmp.eq.s32.totalorder %s19, 2
      %p126 = por %p124, %p125
      %p127 = scmp.ne.s32.totalorder %s118, %s119
      %p128 = scmp.eq.s32.totalorder %s19, 0
      %p129 = por %p127, %p128
      %p130 = scmp.ne.s32.totalorder %s118, %s119
      %p131 = scmp.eq.s32.totalorder %s20, 2
      %p132 = por %p130, %p131
      %p134 = scmp.ne.s32.totalorder %s119, %s133
      %p135 = scmp.eq.s32.totalorder %s20, 0
      %p136 = por %p134, %p135
      %s138 = sadd.s32 %s137, 1
      %p141 = scmp.eq.s32.totalorder %s14, 2
      %p142 = scmp.ne.s32.totalorder %s137, %s139
      %p143 = scmp.eq.s32.totalorder %s14, 0
      %p144 = por %p142, %p143
      %p145 = scmp.ne.s32.totalorder %s137, %s139
      %p146 = scmp.eq.s32.totalorder %s19, 2
      %p147 = por %p145, %p146
      %p148 = scmp.ne.s32.totalorder %s139, %s140
      %p149 = scmp.eq.s32.totalorder %s19, 0
      %p150 = por %p148, %p149
      %p151 = scmp.ne.s32.totalorder %s139, %s140
      %p152 = scmp.eq.s32.totalorder %s20, 2
      %p153 = por %p151, %p152
      %p155 = scmp.ne.s32.totalorder %s140, %s154
      %p156 = scmp.eq.s32.totalorder %s20, 0
      %p157 = por %p155, %p156
      %s159 = sadd.s32 %s158, 1
      %p162 = scmp.eq.s32.totalorder %s14, 2
      %p163 = scmp.ne.s32.totalorder %s158, %s160
      %p164 = scmp.eq.s32.totalorder %s14, 0
      %p165 = por %p163, %p164
      %p166 = scmp.ne.s32.totalorder %s158, %s160
      %p167 = scmp.eq.s32.totalorder %s19, 2
      %p168 = por %p166, %p167
      %p169 = scmp.ne.s32.totalorder %s160, %s161
      %p170 = scmp.eq.s32.totalorder %s19, 0
      %p171 = por %p169, %p170
      %p172 = scmp.ne.s32.totalorder %s160, %s161
      %p173 = scmp.eq.s32.totalorder %s20, 2
      %p174 = por %p172, %p173
      %p176 = scmp.ne.s32.totalorder %s161, %s175
      %p177 = scmp.eq.s32.totalorder %s20, 0
      %p178 = por %p176, %p177
      %p179 = scmp.le.s32.totalorder 1, %s14
      %p180 = scmp.lt.s32.totalorder %s14, 4
      %p181 = pnand %p179, %p180
      %p182 = pneg %p181
      // Predicated region
      $region9: #{tpu_custom_call.1} parent=5 // pred_check
        _
      $region10: #{tpu_custom_call.1} parent=5 // pred_check_branch
        %184 = sbr.rel (%p181) target = $region12
      $region11: #{tpu_custom_call.1} parent=5 // pred_region
        %s185 = ssub.s32 %s14, 1
        // Predicated region
        $region13: #{tpu_custom_call.1} parent=11 // pred_check
          %p186 = pneg %p35
        $region14: #{tpu_custom_call.1} parent=11 // pred_check_branch
          %188 = sbr.rel (%p186) target = $region16
        $region15: #{tpu_custom_call.1} parent=11 // pred_region
          _
        $region16: #{tpu_custom_call.1} parent=11 // pred_fallthru
          _
        // Predicated region
        $region17: #{tpu_custom_call.1} parent=11 // pred_check
          %p189 = pneg %p56
        $region18: #{tpu_custom_call.1} parent=11 // pred_check_branch
          %191 = sbr.rel (%p189) target = $region20
        $region19: #{tpu_custom_call.1} parent=11 // pred_region
          %s193 = ssub.s32 256, 256
          %194 = vsyncadd [#allocation4], %s193
          %s195 = sshll.u32 [#allocation3], 4
          %s196 = int_to_ptr.vmem [resolvable:$true] %s195
          %201 = dma.hbm_to_vmem [thread:$0]  %s1, 256, %s196, [#allocation4], 128, 128, 8
        $region20: #{tpu_custom_call.1} parent=11 // pred_fallthru
          _
        // Predicated region
        $region21: #{tpu_custom_call.1} parent=11 // pred_check
          %p202 = pneg %p129
        $region22: #{tpu_custom_call.1} parent=11 // pred_check_branch
          %204 = sbr.rel (%p202) target = $region24
        $region23: #{tpu_custom_call.1} parent=11 // pred_region
          _
        $region24: #{tpu_custom_call.1} parent=11 // pred_fallthru
          _
        // Predicated region
        $region25: #{tpu_custom_call.1} parent=11 // pred_check
          %p205 = pneg %p150
        $region26: #{tpu_custom_call.1} parent=11 // pred_check_branch
          %207 = sbr.rel (%p205) target = $region28
        $region27: #{tpu_custom_call.1} parent=11 // pred_region
          _
        $region28: #{tpu_custom_call.1} parent=11 // pred_fallthru
          _
      $region12: #{tpu_custom_call.1} parent=5 // pred_fallthru
        _
      %p208 = scmp.lt.s32.totalorder %s14, 3
      // Predicated region
      $region29: #{tpu_custom_call.1} parent=5 // pred_check
        %p209 = pneg %p208
      $region30: #{tpu_custom_call.1} parent=5 // pred_check_branch
        %211 = sbr.rel (%p209) target = $region32
      $region31: #{tpu_custom_call.1} parent=5 // pred_region
        // Predicated region
        $region33: #{tpu_custom_call.1} parent=31 // pred_check
          %p212 = pneg %p76
        $region34: #{tpu_custom_call.1} parent=31 // pred_check_branch
          %214 = sbr.rel (%p212) target = $region36
        $region35: #{tpu_custom_call.1} parent=31 // pred_region
          %p215 = scmp.lt.s32.totalorder %s14, 2
          %s216 = scalar_select %p215, %s14, 2
          %s217 = smul.addr %s216, 2
          %s218 = smul.addr %s217, 8
          %s219 = scalar_lea.vmem %s2, %s218
        $region36: #{tpu_custom_call.1} parent=31 // pred_fallthru
          _
        // Predicated region
        $region37: #{tpu_custom_call.1} parent=31 // pred_check
          %p220 = pneg %p102
        $region38: #{tpu_custom_call.1} parent=31 // pred_check_branch
          %222 = sbr.rel (%p220) target = $region40
        $region39: #{tpu_custom_call.1} parent=31 // pred_region
          %p223 = scmp.lt.s32.totalorder %s14, 2
          %s224 = scalar_select %p223, %s14, 2
          %s225 = smul.addr %s224, 3
          %s226 = smul.addr %s225, 2
          %s227 = scalar_lea.vmem %s3, %s226
        $region40: #{tpu_custom_call.1} parent=31 // pred_fallthru
          _
      $region32: #{tpu_custom_call.1} parent=5 // pred_fallthru
        _
      %p228 = scmp.le.s32.totalorder 1, %s14
      %p229 = scmp.lt.s32.totalorder %s14, 4
      %p230 = pnand %p228, %p229
      %p231 = pneg %p230
      // Predicated region
      $region41: #{tpu_custom_call.1} parent=5 // pred_check
        _
      $region42: #{tpu_custom_call.1} parent=5 // pred_check_branch
        %233 = sbr.rel (%p230) target = $region44
      $region43: #{tpu_custom_call.1} parent=5 // pred_region
        %s234 = ssub.s32 %s14, 1
        // Predicated region
        $region45: #{tpu_custom_call.1} parent=43 // pred_check
          %p235 = pneg %p56
        $region46: #{tpu_custom_call.1} parent=43 // pred_check_branch
          %237 = sbr.rel (%p235) target = $region48
        $region47: #{tpu_custom_call.1} parent=43 // pred_region
          %238 = dma.done [#allocation4], 256
        $region48: #{tpu_custom_call.1} parent=43 // pred_fallthru
          _
        %p239 = pneg %p35
        %p240 = pneg %p32
        %p241 = pneg %p56
        %p242 = pneg %p53
        %p243 = scmp.lt.s32.totalorder %s19, 2
        %s244 = scalar_select %p243, %s19, 2
        %s245 = smul.addr %s244, 2
        %s246 = smul.addr %s245, 8
        %s247 = scalar_lea.vmem %s2, %s246
        %p248 = pneg %p82
        %p249 = pneg %p79
        %p250 = scmp.lt.s32.totalorder %s19, 2
        %s251 = scalar_select %p250, %s19, 2
        %s252 = smul.addr %s251, 3
        %s253 = smul.addr %s252, 2
        %s254 = scalar_lea.vmem %s3, %s253
        %p255 = pneg %p108
        %p256 = pneg %p105
        %p257 = pneg %p129
        %p258 = pneg %p126
        %p259 = pneg %p150
        %p260 = pneg %p147
        %p261 = pneg %p171
        %p262 = pneg %p168
        %p263 = scmp.lt.s32.totalorder %s19, 2
        %s264 = scalar_select %p263, %s19, 2
        %s265 = smul.addr %s264, 2
        %s266 = smul.addr %s265, 8
        %s267 = scalar_lea.vmem %s2, %s266
        %p268 = scmp.lt.s32.totalorder %s19, 2
        %s269 = scalar_select %p268, %s19, 2
        %s270 = smul.addr %s269, 3
        %s271 = smul.addr %s270, 2
        %s272 = scalar_lea.vmem %s3, %s271
        %p274 = scmp.eq.s32.totalorder %s19, 0
        // Predicated region
        $region49: #{tpu_custom_call.1} parent=43 // pred_check
          %p275 = pneg %p274
        $region50: #{tpu_custom_call.1} parent=43 // pred_check_branch
          %277 = sbr.rel (%p275) target = $region52
        $region51: #{tpu_custom_call.1} parent=43 // pred_region
          %v278 = vld [vmem:[%s0] sm:$0xff]
          %v279 = vld [vmem:[%s0 + $0x8] sm:$0xff]
          %v280 = vld [vmem:[%s0 + $0x10] sm:$0xff]
          %v281 = vld [vmem:[#allocation3] sm:$0xff]
          %v282 = vld [vmem:[#allocation3 + $0x8] sm:$0xff]
          %vm283 = vcmask 130048
          %v285 = vsel %vm283, %v278, 0
          %v288 = vsel %vm283, %v279, 0
          %v291 = vsel %vm283, %v280, 0
          %293 = vmatprep.subr.mxu0 0.0
          %294 = vmatpush1.msra.mxu0 %v281
          %295 = vmatprep.subr.mxu0 0.0
          %296 = vmatpush1.msra.mxu0 %v282
          %297 = vmatprep.subr.mxu0 0.0
          %298 = vmatpush1.msra.mxu0 0.0
          %299 = vmatprep.subr.mxu0 0.0
          %300 = vmatpush1.msra.mxu0 0.0
          %301 = vmatprep.subr.mxu0 0.0
          %302 = vmatpush1.msra.mxu0 0.0
          %303 = vmatprep.subr.mxu0 0.0
          %304 = vmatpush1.msra.mxu0 0.0
          %305 = vmatprep.subr.mxu0 0.0
          %306 = vmatpush1.msra.mxu0 0.0
          %307 = vmatprep.subr.mxu0 0.0
          %308 = vmatpush1.msra.mxu0 0.0
          %309 = vmatprep.subr.mxu0 0.0
          %310 = vmatpush1.msra.mxu0 0.0
          %311 = vmatprep.subr.mxu0 0.0
          %312 = vmatpush1.msra.mxu0 0.0
          %313 = vmatprep.subr.mxu0 0.0
          %314 = vmatpush1.msra.mxu0 0.0
          %315 = vmatprep.subr.mxu0 0.0
          %316 = vmatpush1.msra.mxu0 0.0
          %317 = vmatprep.subr.mxu0 0.0
          %318 = vmatpush1.msra.mxu0 0.0
          %319 = vmatprep.subr.mxu0 0.0
          %320 = vmatpush1.msra.mxu0 0.0
          %321 = vmatprep.subr.mxu0 0.0
          %322 = vmatpush1.msra.mxu0 0.0
          %323 = vmatprep.subr.mxu0 0.0
          %324 = vmatpush1.msra.mxu0 0.0
          %325 = vmatprep.subr.mxu0 0.0
          %326 = vmatpush1.msra.mxu0 0.0
          %327 = vmatprep.subr.mxu0 0.0
          %328 = vmatpush1.msra.mxu0 0.0
          %329 = vmatprep.subr.mxu0 0.0
          %330 = vmatpush1.msra.mxu0 0.0
          %331 = vmatprep.subr.mxu0 0.0
          %332 = vmatpush1.msra.mxu0 0.0
          %333 = vmatprep.subr.mxu0 0.0
          %334 = vmatpush1.msra.mxu0 0.0
          %335 = vmatprep.subr.mxu0 0.0
          %336 = vmatpush1.msra.mxu0 0.0
          %337 = vmatprep.subr.mxu0 0.0
          %338 = vmatpush1.msra.mxu0 0.0
          %339 = vmatprep.subr.mxu0 0.0
          %340 = vmatpush1.msra.mxu0 0.0
          %341 = vmatprep.subr.mxu0 0.0
          %342 = vmatpush1.msra.mxu0 0.0
          %343 = vmatprep.subr.mxu0 0.0
          %344 = vmatpush1.msra.mxu0 0.0
          %345 = vmatprep.subr.mxu0 0.0
          %346 = vmatpush1.msra.mxu0 0.0
          %347 = vmatprep.subr.mxu0 0.0
          %348 = vmatpush1.msra.mxu0 0.0
          %349 = vmatprep.subr.mxu0 0.0
          %350 = vmatpush1.msra.mxu0 0.0
          %351 = vmatprep.subr.mxu0 0.0
          %352 = vmatpush1.msra.mxu0 0.0
          %353 = vmatprep.subr.mxu0 0.0
          %354 = vmatpush1.msra.mxu0 0.0
          %355 = vmatprep.subr.mxu0 0.0
          %356 = vmatpush1.msra.mxu0 0.0
          %357 = vmatprep.mubr.f32.mxu0 0.0
          %358 = vmatmul.mubr.f32.gmra.mrb[0].mxu0 %v285
          %v359 = vpop.f32.mrb[0].mxu0
          %v360 = vadd.f32 0.0, %v359
          %v361 = vpop.f32.mrb[0].mxu0
          %362 = vmatprep.mubr.f32.mxu0 0.0
          %363 = vmatmul.mubr.f32.gmra.mrb[0].mxu0 %v288
          %v364 = vpop.f32.mrb[0].mxu0
          %v365 = vadd.f32 0.0, %v364
          %v366 = vpop.f32.mrb[0].mxu0
          %367 = vmatprep.mubr.f32.mxu0 0.0
          %368 = vmatmul.mubr.f32.gmra.mrb[0].mxu0 %v291
          %v369 = vpop.f32.mrb[0].mxu0
          %v370 = vadd.f32 0.0, %v369
          %v371 = vpop.f32.mrb[0].mxu0
          %372 = vdwg.mxu0
          %vm373 = vcmask 261120
          %374 = vst.msk [vmem:[#allocation2] sm:$0xff] %vm373, %v360
          %375 = vst.msk [vmem:[#allocation2 + $0x8] sm:$0xff] %vm373, %v365
          %376 = vst.msk [vmem:[#allocation2 + $0x10] sm:$0xff] %vm373, %v370
        $region52: #{tpu_custom_call.1} parent=43 // pred_fallthru
          _
        %v377 = vld [vmem:[%s0] sm:$0xff]
        %v378 = vld [vmem:[%s0 + $0x8] sm:$0xff]
        %v379 = vld [vmem:[%s0 + $0x10] sm:$0xff]
        %v380 = vld [vmem:[%s0 + $0x18] sm:$0xff]
        %v381 = vld [vmem:[%s0 + $0x20] sm:$0xff]
        %v382 = vld [vmem:[%s0 + $0x28] sm:$0xff]
        %v383 = vld [vmem:[%s267] sm:$0xff]
        %v384 = vld [vmem:[%s267 + $0x8] sm:$0xff]
        %vm385 = vcmask 130048
        %v387 = vsel %vm385, %v377, 0
        %v390 = vsel %vm385, %v378, 0
        %v393 = vsel %vm385, %v379, 0
        %v396 = vsel %vm385, %v380, 0
        %v399 = vsel %vm385, %v381, 0
        %v402 = vsel %vm385, %v382, 0
        %404 = vmatprep.subr.mxu0 0.0
        %405 = vmatpush1.msra.mxu0 %v383
        %406 = vmatprep.subr.mxu0 0.0
        %407 = vmatpush1.msra.mxu0 %v384
        %408 = vmatprep.subr.mxu0 0.0
        %409 = vmatpush1.msra.mxu0 0.0
        %410 = vmatprep.subr.mxu0 0.0
        %411 = vmatpush1.msra.mxu0 0.0
        %412 = vmatprep.subr.mxu0 0.0
        %413 = vmatpush1.msra.mxu0 0.0
        %414 = vmatprep.subr.mxu0 0.0
        %415 = vmatpush1.msra.mxu0 0.0
        %416 = vmatprep.subr.mxu0 0.0
        %417 = vmatpush1.msra.mxu0 0.0
        %418 = vmatprep.subr.mxu0 0.0
        %419 = vmatpush1.msra.mxu0 0.0
        %420 = vmatprep.subr.mxu0 0.0
        %421 = vmatpush1.msra.mxu0 0.0
        %422 = vmatprep.subr.mxu0 0.0
        %423 = vmatpush1.msra.mxu0 0.0
        %424 = vmatprep.subr.mxu0 0.0
        %425 = vmatpush1.msra.mxu0 0.0
        %426 = vmatprep.subr.mxu0 0.0
        %427 = vmatpush1.msra.mxu0 0.0
        %428 = vmatprep.subr.mxu0 0.0
        %429 = vmatpush1.msra.mxu0 0.0
        %430 = vmatprep.subr.mxu0 0.0
        %431 = vmatpush1.msra.mxu0 0.0
        %432 = vmatprep.subr.mxu0 0.0
        %433 = vmatpush1.msra.mxu0 0.0
        %434 = vmatprep.subr.mxu0 0.0
        %435 = vmatpush1.msra.mxu0 0.0
        %436 = vmatprep.subr.mxu0 0.0
        %437 = vmatpush1.msra.mxu0 0.0
        %438 = vmatprep.subr.mxu0 0.0
        %439 = vmatpush1.msra.mxu0 0.0
        %440 = vmatprep.subr.mxu0 0.0
        %441 = vmatpush1.msra.mxu0 0.0
        %442 = vmatprep.subr.mxu0 0.0
        %443 = vmatpush1.msra.mxu0 0.0
        %444 = vmatprep.subr.mxu0 0.0
        %445 = vmatpush1.msra.mxu0 0.0
        %446 = vmatprep.subr.mxu0 0.0
        %447 = vmatpush1.msra.mxu0 0.0
        %448 = vmatprep.subr.mxu0 0.0
        %449 = vmatpush1.msra.mxu0 0.0
        %450 = vmatprep.subr.mxu0 0.0
        %451 = vmatpush1.msra.mxu0 0.0
        %452 = vmatprep.subr.mxu0 0.0
        %453 = vmatpush1.msra.mxu0 0.0
        %454 = vmatprep.subr.mxu0 0.0
        %455 = vmatpush1.msra.mxu0 0.0
        %456 = vmatprep.subr.mxu0 0.0
        %457 = vmatpush1.msra.mxu0 0.0
        %458 = vmatprep.subr.mxu0 0.0
        %459 = vmatpush1.msra.mxu0 0.0
        %460 = vmatprep.subr.mxu0 0.0
        %461 = vmatpush1.msra.mxu0 0.0
        %462 = vmatprep.subr.mxu0 0.0
        %463 = vmatpush1.msra.mxu0 0.0
        %464 = vmatprep.subr.mxu0 0.0
        %465 = vmatpush1.msra.mxu0 0.0
        %466 = vmatprep.subr.mxu0 0.0
        %467 = vmatpush1.msra.mxu0 0.0
        %468 = vmatprep.mubr.f32.mxu0 0.0
        %469 = vmatmul.mubr.f32.gmra.mrb[0].mxu0 %v387
        %v470 = vpop.f32.mrb[0].mxu0
        %v471 = vadd.f32 0.0, %v470
        %v472 = vpop.f32.mrb[0].mxu0
        %473 = vmatprep.mubr.f32.mxu0 0.0
        %474 = vmatmul.mubr.f32.gmra.mrb[0].mxu0 %v390
        %v475 = vpop.f32.mrb[0].mxu0
        %v476 = vadd.f32 0.0, %v475
        %v477 = vpop.f32.mrb[0].mxu0
        %478 = vmatprep.mubr.f32.mxu0 0.0
        %479 = vmatmul.mubr.f32.gmra.mrb[0].mxu0 %v393
        %v480 = vpop.f32.mrb[0].mxu0
        %v481 = vadd.f32 0.0, %v480
        %v482 = vpop.f32.mrb[0].mxu0
        %483 = vmatprep.mubr.f32.mxu0 0.0
        %484 = vmatmul.mubr.f32.gmra.mrb[0].mxu0 %v396
        %v485 = vpop.f32.mrb[0].mxu0
        %v486 = vadd.f32 0.0, %v485
        %v487 = vpop.f32.mrb[0].mxu0
        %488 = vmatprep.mubr.f32.mxu0 0.0
        %489 = vmatmul.mubr.f32.gmra.mrb[0].mxu0 %v399
        %v490 = vpop.f32.mrb[0].mxu0
        %v491 = vadd.f32 0.0, %v490
        %v492 = vpop.f32.mrb[0].mxu0
        %493 = vmatprep.mubr.f32.mxu0 0.0
        %494 = vmatmul.mubr.f32.gmra.mrb[0].mxu0 %v402
        %v495 = vpop.f32.mrb[0].mxu0
        %v496 = vadd.f32 0.0, %v495
        %v497 = vpop.f32.mrb[0].mxu0
        %498 = vdwg.mxu0
        %505 = vrot.lane.b32.xlu0 %v471, 96
        %v506 = vpop.permute.xlu0 %505
        %507 = vrot.lane.b32.xlu0 %v476, 96
        %v508 = vpop.permute.xlu0 %507
        %509 = vrot.lane.b32.xlu0 %v481, 96
        %v510 = vpop.permute.xlu0 %509
        %511 = vrot.lane.b32.xlu0 %v486, 96
        %v512 = vpop.permute.xlu0 %511
        %513 = vrot.lane.b32.xlu0 %v491, 96
        %v514 = vpop.permute.xlu0 %513
        %515 = vrot.lane.b32.xlu0 %v496, 96
        %v516 = vpop.permute.xlu0 %515
        %523 = vxpose.xlu0.b32.start [1/16] %v506, 128
        %524 = vxpose.xlu0.b32.cont [2/16] %v508, 128
        %525 = vxpose.xlu0.b32.cont [3/16] %v510, 128
        %526 = vxpose.xlu0.b32.cont [4/16] %v512, 128
        %527 = vxpose.xlu0.b32.cont [5/16] %v514, 128
        %528 = vxpose.xlu0.b32.cont [6/16] %v516, 128
        %529 = vxpose.xlu0.b32.cont [7/16] 0.0, 128
        %530 = vxpose.xlu0.b32.cont [8/16] 0.0, 128
        %531 = vxpose.xlu0.b32.cont [9/16] 0.0, 128
        %532 = vxpose.xlu0.b32.cont [10/16] 0.0, 128
        %533 = vxpose.xlu0.b32.cont [11/16] 0.0, 128
        %534 = vxpose.xlu0.b32.cont [12/16] 0.0, 128
        %535 = vxpose.xlu0.b32.cont [13/16] 0.0, 128
        %536 = vxpose.xlu0.b32.cont [14/16] 0.0, 128
        %537 = vxpose.xlu0.b32.cont [15/16] 0.0, 128
        %538 = vxpose.xlu0.b32.end [16/16] 0.0, 128
        %v539 = vpop.trf.xlu0
        %v540 = vpop.trf.xlu0
        %v541 = vpop.trf.xlu0
        %v542 = vpop.trf.xlu0
        %v543 = vpop.trf.xlu0
        %v544 = vpop.trf.xlu0
        %v545 = vpop.trf.xlu0
        %v546 = vpop.trf.xlu0
        %v547 = vpop.trf.xlu0
        %v548 = vpop.trf.xlu0
        %v549 = vpop.trf.xlu0
        %v550 = vpop.trf.xlu0
        %v551 = vpop.trf.xlu0
        %v552 = vpop.trf.xlu0
        %v553 = vpop.trf.xlu0
        %v554 = vpop.trf.xlu0
        %555 = vrot.lane.b32.xlu0 %v471, 92
        %v556 = vpop.permute.xlu0 %555
        %557 = vrot.lane.b32.xlu0 %v476, 92
        %v558 = vpop.permute.xlu0 %557
        %559 = vrot.lane.b32.xlu0 %v481, 92
        %v560 = vpop.permute.xlu0 %559
        %564 = vxpose.xlu0.b32.start [1/16] %v556, 128
        %565 = vxpose.xlu0.b32.cont [2/16] %v558, 128
        %566 = vxpose.xlu0.b32.cont [3/16] %v560, 128
        %567 = vxpose.xlu0.b32.cont [4/16] 0.0, 128
        %568 = vxpose.xlu0.b32.cont [5/16] 0.0, 128
        %569 = vxpose.xlu0.b32.cont [6/16] 0.0, 128
        %570 = vxpose.xlu0.b32.cont [7/16] 0.0, 128
        %571 = vxpose.xlu0.b32.cont [8/16] 0.0, 128
        %572 = vxpose.xlu0.b32.cont [9/16] 0.0, 128
        %573 = vxpose.xlu0.b32.cont [10/16] 0.0, 128
        %574 = vxpose.xlu0.b32.cont [11/16] 0.0, 128
        %575 = vxpose.xlu0.b32.cont [12/16] 0.0, 128
        %576 = vxpose.xlu0.b32.cont [13/16] 0.0, 128
        %577 = vxpose.xlu0.b32.cont [14/16] 0.0, 128
        %578 = vxpose.xlu0.b32.cont [15/16] 0.0, 128
        %579 = vxpose.xlu0.b32.end [16/16] 0.0, 128
        %v580 = vpop.trf.xlu0
        %v581 = vpop.trf.xlu0
        %v582 = vpop.trf.xlu0
        %v583 = vpop.trf.xlu0
        %v584 = vpop.trf.xlu0
        %v585 = vpop.trf.xlu0
        %v586 = vpop.trf.xlu0
        %v587 = vpop.trf.xlu0
        %v588 = vpop.trf.xlu0
        %v589 = vpop.trf.xlu0
        %v590 = vpop.trf.xlu0
        %v591 = vpop.trf.xlu0
        %v592 = vpop.trf.xlu0
        %v593 = vpop.trf.xlu0
        %v594 = vpop.trf.xlu0
        %v595 = vpop.trf.xlu0
        %v596 = vlaneseq
        %v597 = vshrl.u32 %v596, 7
        %v598 = vsub.s32 0, %v597
        %v599 = vrot.slane %v580, %v598
        %601 = vbcast.lane.b32.xlu0 %v599, 256
        %v602 = vpop.permute.xlu0 %601
        %s604 = sor.u32 256, 8
        %605 = vbcast.lane.b32.xlu0 %v599, %s604
        %v606 = vpop.permute.xlu0 %605
        %s608 = sor.u32 256, 16
        %609 = vbcast.lane.b32.xlu0 %v599, %s608
        %v610 = vpop.permute.xlu0 %609
        %v611 = vlaneseq
        %v612 = vshrl.u32 %v611, 7
        %v613 = vsub.s32 1, %v612
        %v614 = vrot.slane %v580, %v613
        %616 = vbcast.lane.b32.xlu0 %v614, 256
        %v617 = vpop.permute.xlu0 %616
        %s619 = sor.u32 256, 8
        %620 = vbcast.lane.b32.xlu0 %v614, %s619
        %v621 = vpop.permute.xlu0 %620
        %s623 = sor.u32 256, 16
        %624 = vbcast.lane.b32.xlu0 %v614, %s623
        %v625 = vpop.permute.xlu0 %624
        %v626 = vlaneseq
        %v627 = vshrl.u32 %v626, 7
        %v628 = vsub.s32 2, %v627
        %v629 = vrot.slane %v580, %v628
        %631 = vbcast.lane.b32.xlu0 %v629, 256
        %v632 = vpop.permute.xlu0 %631
        %s634 = sor.u32 256, 8
        %635 = vbcast.lane.b32.xlu0 %v629, %s634
        %v636 = vpop.permute.xlu0 %635
        %s638 = sor.u32 256, 16
        %639 = vbcast.lane.b32.xlu0 %v629, %s638
        %v640 = vpop.permute.xlu0 %639
        %v641 = vlaneseq
        %v642 = vshrl.u32 %v641, 7
        %v643 = vsub.s32 3, %v642
        %v644 = vrot.slane %v580, %v643
        %646 = vbcast.lane.b32.xlu0 %v644, 256
        %v647 = vpop.permute.xlu0 %646
        %s649 = sor.u32 256, 8
        %650 = vbcast.lane.b32.xlu0 %v644, %s649
        %v651 = vpop.permute.xlu0 %650
        %s653 = sor.u32 256, 16
        %654 = vbcast.lane.b32.xlu0 %v644, %s653
        %v655 = vpop.permute.xlu0 %654
        %v658 = vunpack.c.l.s4 1966171168
        %v659 = vunpack.c.0.s8 %v658
        %v660 = vlaneseq
        %v661 = vshrl.u32 %v660, 7
        %v662 = vsub.s32 %v659, %v661
        %v663 = vrot.slane %v539, %v662
        %v664 = vcombine.high %v663, %v663
        %v666 = vunpack.c.l.s4 1966171168
        %v667 = vunpack.c.0.s8 %v666
        %v668 = vlaneseq
        %v669 = vshrl.u32 %v668, 7
        %v670 = vsub.s32 %v667, %v669
        %v671 = vrot.slane %v663, %v670
        %v673 = vunpack.c.l.s4 1966171168
        %v674 = vunpack.c.0.s8 %v673
        %v675 = vlaneseq
        %v676 = vshrl.u32 %v675, 7
        %v677 = vsub.s32 %v674, %v676
        %v678 = vrot.slane %v664, %v677
        %v679 = vcombine.high %v671, %v671
        %v680 = vcombine.high %v678, %v678
        %v681 = vlaneseq
        %v682 = vshrl.u32 %v681, 7
        %v683 = vsub.s32 0, %v682
        %v684 = vrot.slane %v671, %v683
        %v685 = vlaneseq
        %v686 = vshrl.u32 %v685, 7
        %v687 = vsub.s32 0, %v686
        %v688 = vrot.slane %v678, %v687
        %v689 = vlaneseq
        %v690 = vshrl.u32 %v689, 7
        %v691 = vsub.s32 0, %v690
        %v692 = vrot.slane %v679, %v691
        %v693 = vlaneseq
        %v694 = vshrl.u32 %v693, 7
        %v695 = vsub.s32 0, %v694
        %v696 = vrot.slane %v680, %v695
        %v701 = vadd.f32 %v602, %v684
        %v702 = vadd.f32 %v606, %v684
        %v703 = vadd.f32 %v610, %v684
        %v704 = vadd.f32 %v617, %v688
        %v705 = vadd.f32 %v621, %v688
        %v706 = vadd.f32 %v625, %v688
        %v707 = vadd.f32 %v632, %v692
        %v708 = vadd.f32 %v636, %v692
        %v709 = vadd.f32 %v640, %v692
        %v710 = vadd.f32 %v647, %v696
        %v711 = vadd.f32 %v651, %v696
        %v712 = vadd.f32 %v655, %v696
        %vm713 = vcmp.gt.f32.partialorder %v701, 0.0
        %vm714 = vcmp.gt.f32.partialorder %v702, 0.0
        %vm715 = vcmp.gt.f32.partialorder %v703, 0.0
        %vm716 = vcmp.gt.f32.partialorder %v704, 0.0
        %vm717 = vcmp.gt.f32.partialorder %v705, 0.0
        %vm718 = vcmp.gt.f32.partialorder %v706, 0.0
        %vm719 = vcmp.gt.f32.partialorder %v707, 0.0
        %vm720 = vcmp.gt.f32.partialorder %v708, 0.0
        %vm721 = vcmp.gt.f32.partialorder %v709, 0.0
        %vm722 = vcmp.gt.f32.partialorder %v710, 0.0
        %vm723 = vcmp.gt.f32.partialorder %v711, 0.0
        %vm724 = vcmp.gt.f32.partialorder %v712, 0.0
        %v725 = vmul.f32 %v701, 0.2
        %v726 = vmul.f32 %v702, 0.2
        %v727 = vmul.f32 %v703, 0.2
        %v728 = vmul.f32 %v704, 0.2
        %v729 = vmul.f32 %v705, 0.2
        %v730 = vmul.f32 %v706, 0.2
        %v731 = vmul.f32 %v707, 0.2
        %v732 = vmul.f32 %v708, 0.2
        %v733 = vmul.f32 %v709, 0.2
        %v734 = vmul.f32 %v710, 0.2
        %v735 = vmul.f32 %v711, 0.2
        %v736 = vmul.f32 %v712, 0.2
        %v737 = vsel %vm713, %v701, %v725
        %v738 = vsel %vm714, %v702, %v726
        %v739 = vsel %vm715, %v703, %v727
        %v740 = vsel %vm716, %v704, %v728
        %v741 = vsel %vm717, %v705, %v729
        %v742 = vsel %vm718, %v706, %v730
        %v743 = vsel %vm719, %v707, %v731
        %v744 = vsel %vm720, %v708, %v732
        %v745 = vsel %vm721, %v709, %v733
        %v746 = vsel %vm722, %v710, %v734
        %v747 = vsel %vm723, %v711, %v735
        %v748 = vsel %vm724, %v712, %v736
        %v749 = vld [vmem:[%s272] sm:$0x3]
        %v750 = vld [vmem:[%s272 + $0x2] sm:$0x3]
        %v751 = vld [vmem:[%s272 + $0x4] sm:$0x3]
        %v752 = vunpack.c.0.s8 %v749
        %v753 = vunpack.c.0.s8 %v750
        %v754 = vunpack.c.0.s8 %v751
        %v755 = vcvt.s32.f32 %v752
        %v756 = vcvt.s32.f32 %v753
        %v757 = vcvt.s32.f32 %v754
        %v758 = vsub.f32 %v755, 1.0
        %v759 = vsub.f32 %v756, 1.0
        %v760 = vsub.f32 %v757, 1.0
        %v761 = vmul.f32 %v758, 1e+30
        %v762 = vmul.f32 %v759, 1e+30
        %v763 = vmul.f32 %v760, 1e+30
        %v764 = vadd.f32 %v737, %v761
        %v765 = vadd.f32 %v738, %v762
        %v766 = vadd.f32 %v739, %v763
        %v767 = vadd.f32 %v740, %v761
        %v768 = vadd.f32 %v741, %v762
        %v769 = vadd.f32 %v742, %v763
        %v770 = vadd.f32 %v743, %v761
        %v771 = vadd.f32 %v744, %v762
        %v772 = vadd.f32 %v745, %v763
        %v773 = vadd.f32 %v746, %v761
        %v774 = vadd.f32 %v747, %v762
        %v775 = vadd.f32 %v748, %v763
        %vm776 = vcmask 392192
        %v777 = vsel %vm776, %v764, -inf
        %778 = vmax.xlane.f32.xlu0 %v777
        %v779 = vpop.xlane.xlu0 %778
        %v780 = vsel %vm776, %v765, -inf
        %781 = vmax.xlane.f32.xlu0 %v780
        %v782 = vpop.xlane.xlu0 %781
        %v783 = vsel %vm776, %v766, -inf
        %784 = vmax.xlane.f32.xlu0 %v783
        %v785 = vpop.xlane.xlu0 %784
        %v786 = vsel %vm776, %v767, -inf
        %787 = vmax.xlane.f32.xlu0 %v786
        %v788 = vpop.xlane.xlu0 %787
        %v789 = vsel %vm776, %v768, -inf
        %790 = vmax.xlane.f32.xlu0 %v789
        %v791 = vpop.xlane.xlu0 %790
        %v792 = vsel %vm776, %v769, -inf
        %793 = vmax.xlane.f32.xlu0 %v792
        %v794 = vpop.xlane.xlu0 %793
        %v795 = vsel %vm776, %v770, -inf
        %796 = vmax.xlane.f32.xlu0 %v795
        %v797 = vpop.xlane.xlu0 %796
        %v798 = vsel %vm776, %v771, -inf
        %799 = vmax.xlane.f32.xlu0 %v798
        %v800 = vpop.xlane.xlu0 %799
        %v801 = vsel %vm776, %v772, -inf
        %802 = vmax.xlane.f32.xlu0 %v801
        %v803 = vpop.xlane.xlu0 %802
        %v804 = vsel %vm776, %v773, -inf
        %805 = vmax.xlane.f32.xlu0 %v804
        %v806 = vpop.xlane.xlu0 %805
        %v807 = vsel %vm776, %v774, -inf
        %808 = vmax.xlane.f32.xlu0 %v807
        %v809 = vpop.xlane.xlu0 %808
        %v810 = vsel %vm776, %v775, -inf
        %811 = vmax.xlane.f32.xlu0 %v810
        %v812 = vpop.xlane.xlu0 %811
        %vm813 = vcmp.lt.f32.partialorder %v779, -1e+29
        %vm814 = vcmp.lt.f32.partialorder %v782, -1e+29
        %vm815 = vcmp.lt.f32.partialorder %v785, -1e+29
        %vm816 = vcmp.lt.f32.partialorder %v788, -1e+29
        %vm817 = vcmp.lt.f32.partialorder %v791, -1e+29
        %vm818 = vcmp.lt.f32.partialorder %v794, -1e+29
        %vm819 = vcmp.lt.f32.partialorder %v797, -1e+29
        %vm820 = vcmp.lt.f32.partialorder %v800, -1e+29
        %vm821 = vcmp.lt.f32.partialorder %v803, -1e+29
        %vm822 = vcmp.lt.f32.partialorder %v806, -1e+29
        %vm823 = vcmp.lt.f32.partialorder %v809, -1e+29
        %vm824 = vcmp.lt.f32.partialorder %v812, -1e+29
        %v825 = vsel %vm813, 0.0, %v779
        %v826 = vsel %vm814, 0.0, %v782
        %v827 = vsel %vm815, 0.0, %v785
        %v828 = vsel %vm816, 0.0, %v788
        %v829 = vsel %vm817, 0.0, %v791
        %v830 = vsel %vm818, 0.0, %v794
        %v831 = vsel %vm819, 0.0, %v797
        %v832 = vsel %vm820, 0.0, %v800
        %v833 = vsel %vm821, 0.0, %v803
        %v834 = vsel %vm822, 0.0, %v806
        %v835 = vsel %vm823, 0.0, %v809
        %v836 = vsel %vm824, 0.0, %v812
        %v837 = vsub.f32 %v764, %v825
        %v838 = vsub.f32 %v765, %v826
        %v839 = vsub.f32 %v766, %v827
        %v840 = vsub.f32 %v767, %v828
        %v841 = vsub.f32 %v768, %v829
        %v842 = vsub.f32 %v769, %v830
        %v843 = vsub.f32 %v770, %v831
        %v844 = vsub.f32 %v771, %v832
        %v845 = vsub.f32 %v772, %v833
        %v846 = vsub.f32 %v773, %v834
        %v847 = vsub.f32 %v774, %v835
        %v848 = vsub.f32 %v775, %v836
        %v849 = vmul.f32 %v837, 1.442695
        %v850 = vpow.pop %v849
        %v851 = vmul.f32 %v838, 1.442695
        %v852 = vpow.pop %v851
        %v853 = vmul.f32 %v839, 1.442695
        %v854 = vpow.pop %v853
        %v855 = vmul.f32 %v840, 1.442695
        %v856 = vpow.pop %v855
        %v857 = vmul.f32 %v841, 1.442695
        %v858 = vpow.pop %v857
        %v859 = vmul.f32 %v842, 1.442695
        %v860 = vpow.pop %v859
        %v861 = vmul.f32 %v843, 1.442695
        %v862 = vpow.pop %v861
        %v863 = vmul.f32 %v844, 1.442695
        %v864 = vpow.pop %v863
        %v865 = vmul.f32 %v845, 1.442695
        %v866 = vpow.pop %v865
        %v867 = vmul.f32 %v846, 1.442695
        %v868 = vpow.pop %v867
        %v869 = vmul.f32 %v847, 1.442695
        %v870 = vpow.pop %v869
        %v871 = vmul.f32 %v848, 1.442695
        %v872 = vpow.pop %v871
        %v873 = vsel %vm776, %v850, 0.0
        %874 = vadd.xlane.f32.xlu0 %v873
        %v875 = vpop.xlane.xlu0 %874
        %v876 = vsel %vm776, %v852, 0.0
        %877 = vadd.xlane.f32.xlu0 %v876
        %v878 = vpop.xlane.xlu0 %877
        %v879 = vsel %vm776, %v854, 0.0
        %880 = vadd.xlane.f32.xlu0 %v879
        %v881 = vpop.xlane.xlu0 %880
        %v882 = vsel %vm776, %v856, 0.0
        %883 = vadd.xlane.f32.xlu0 %v882
        %v884 = vpop.xlane.xlu0 %883
        %v885 = vsel %vm776, %v858, 0.0
        %886 = vadd.xlane.f32.xlu0 %v885
        %v887 = vpop.xlane.xlu0 %886
        %v888 = vsel %vm776, %v860, 0.0
        %889 = vadd.xlane.f32.xlu0 %v888
        %v890 = vpop.xlane.xlu0 %889
        %v891 = vsel %vm776, %v862, 0.0
        %892 = vadd.xlane.f32.xlu0 %v891
        %v893 = vpop.xlane.xlu0 %892
        %v894 = vsel %vm776, %v864, 0.0
        %895 = vadd.xlane.f32.xlu0 %v894
        %v896 = vpop.xlane.xlu0 %895
        %v897 = vsel %vm776, %v866, 0.0
        %898 = vadd.xlane.f32.xlu0 %v897
        %v899 = vpop.xlane.xlu0 %898
        %v900 = vsel %vm776, %v868, 0.0
        %901 = vadd.xlane.f32.xlu0 %v900
        %v902 = vpop.xlane.xlu0 %901
        %v903 = vsel %vm776, %v870, 0.0
        %904 = vadd.xlane.f32.xlu0 %v903
        %v905 = vpop.xlane.xlu0 %904
        %v906 = vsel %vm776, %v872, 0.0
        %907 = vadd.xlane.f32.xlu0 %v906
        %v908 = vpop.xlane.xlu0 %907
        %v909 = vadd.f32 %v875, 1e-20
        %v910 = vadd.f32 %v878, 1e-20
        %v911 = vadd.f32 %v881, 1e-20
        %v912 = vadd.f32 %v884, 1e-20
        %v913 = vadd.f32 %v887, 1e-20
        %v914 = vadd.f32 %v890, 1e-20
        %v915 = vadd.f32 %v893, 1e-20
        %v916 = vadd.f32 %v896, 1e-20
        %v917 = vadd.f32 %v899, 1e-20
        %v918 = vadd.f32 %v902, 1e-20
        %v919 = vadd.f32 %v905, 1e-20
        %v920 = vadd.f32 %v908, 1e-20
        %v921 = vrcp.pop %v909
        %v922 = vrcp.pop %v910
        %v923 = vrcp.pop %v911
        %v924 = vrcp.pop %v912
        %v925 = vrcp.pop %v913
        %v926 = vrcp.pop %v914
        %v927 = vrcp.pop %v915
        %v928 = vrcp.pop %v916
        %v929 = vrcp.pop %v917
        %v930 = vrcp.pop %v918
        %v931 = vrcp.pop %v919
        %v932 = vrcp.pop %v920
        %v933 = vmul.f32 %v850, %v921
        %v934 = vmul.f32 %v852, %v922
        %v935 = vmul.f32 %v854, %v923
        %v936 = vmul.f32 %v856, %v924
        %v937 = vmul.f32 %v858, %v925
        %v938 = vmul.f32 %v860, %v926
        %v939 = vmul.f32 %v862, %v927
        %v940 = vmul.f32 %v864, %v928
        %v941 = vmul.f32 %v866, %v929
        %v942 = vmul.f32 %v868, %v930
        %v943 = vmul.f32 %v870, %v931
        %v944 = vmul.f32 %v872, %v932
        %v945 = vpack.c.bf16 %v934, %v933
        %v946 = vpack.c.bf16 %v935, %v935
        %v947 = vpack.c.bf16 %v937, %v936
        %v948 = vpack.c.bf16 %v938, %v938
        %v949 = vpack.c.bf16 %v940, %v939
        %v950 = vpack.c.bf16 %v941, %v941
        %v951 = vpack.c.bf16 %v943, %v942
        %v952 = vpack.c.bf16 %v944, %v944
        %v953 = vpack.c.bf16 %v476, %v471
        %v954 = vpack.c.bf16 %v486, %v481
        %v955 = vpack.c.bf16 %v496, %v491
        %v957 = vsel %vm776, %v945, 0
        %v960 = vsel %vm776, %v946, 0
        %962 = vmatprep.subr.bf16.mxu0 0
        %963 = vmatpush1.bf16.msra.mxu0 %v953
        %964 = vmatprep.subr.bf16.mxu0 0
        %965 = vmatpush1.bf16.msra.mxu0 %v954
        %966 = vmatprep.subr.bf16.mxu0 0
        %967 = vmatpush1.bf16.msra.mxu0 %v955
        %968 = vmatprep.subr.bf16.mxu0 0
        %969 = vmatpush1.bf16.msra.mxu0 0
        %970 = vmatprep.subr.bf16.mxu0 0
        %971 = vmatpush1.bf16.msra.mxu0 0
        %972 = vmatprep.subr.bf16.mxu0 0
        %973 = vmatpush1.bf16.msra.mxu0 0
        %974 = vmatprep.subr.bf16.mxu0 0
        %975 = vmatpush1.bf16.msra.mxu0 0
        %976 = vmatprep.subr.bf16.mxu0 0
        %977 = vmatpush1.bf16.msra.mxu0 0
        %978 = vmatprep.subr.bf16.mxu0 0
        %979 = vmatpush1.bf16.msra.mxu0 0
        %980 = vmatprep.subr.bf16.mxu0 0
        %981 = vmatpush1.bf16.msra.mxu0 0
        %982 = vmatprep.subr.bf16.mxu0 0
        %983 = vmatpush1.bf16.msra.mxu0 0
        %984 = vmatprep.subr.bf16.mxu0 0
        %985 = vmatpush1.bf16.msra.mxu0 0
        %986 = vmatprep.subr.bf16.mxu0 0
        %987 = vmatpush1.bf16.msra.mxu0 0
        %988 = vmatprep.subr.bf16.mxu0 0
        %989 = vmatpush1.bf16.msra.mxu0 0
        %990 = vmatprep.subr.bf16.mxu0 0
        %991 = vmatpush1.bf16.msra.mxu0 0
        %992 = vmatprep.subr.bf16.mxu0 0
        %993 = vmatpush1.bf16.msra.mxu0 0
        %994 = vmatprep.mubr.bf16.mxu0 0
        %995 = vmatmul.mubr.bf16.gmra.mrb[0].mxu0 %v957
        %v996 = vpop.f32.mrb[0].mxu0
        %v997 = vadd.f32 0.0, %v996
        %v998 = vpop.f32.mrb[0].mxu0
        %v999 = vpop.f32.mrb[0].mxu0
        %v1000 = vadd.f32 0.0, %v999
        %v1001 = vpop.f32.mrb[0].mxu0
        %1002 = vmatprep.mubr.bf16.mxu0 0
        %1003 = vmatmul.mubr.bf16.gmra.mrb[0].mxu0 %v960
        %v1004 = vpop.f32.mrb[0].mxu0
        %v1005 = vadd.f32 0.0, %v1004
        %v1006 = vpop.f32.mrb[0].mxu0
        %v1007 = vpop.f32.mrb[0].mxu0
        %v1008 = vpop.f32.mrb[0].mxu0
        %1009 = vdwg.mxu0
        %1013 = vrot.lane.b32.xlu0 %v953, 120
        %v1014 = vpop.permute.xlu0 %1013
        %1015 = vrot.lane.b32.xlu0 %v954, 120
        %v1016 = vpop.permute.xlu0 %1015
        %1017 = vrot.lane.b32.xlu0 %v955, 120
        %v1018 = vpop.permute.xlu0 %1017
        %v1023 = vsel %vm776, %v947, 0
        %v1026 = vsel %vm776, %v948, 0
        %1028 = vmatprep.subr.bf16.mxu0 0
        %1029 = vmatpush1.bf16.msra.mxu0 %v1014
        %1030 = vmatprep.subr.bf16.mxu0 0
        %1031 = vmatpush1.bf16.msra.mxu0 %v1016
        %1032 = vmatprep.subr.bf16.mxu0 0
        %1033 = vmatpush1.bf16.msra.mxu0 %v1018
        %1034 = vmatprep.subr.bf16.mxu0 0
        %1035 = vmatpush1.bf16.msra.mxu0 0
        %1036 = vmatprep.subr.bf16.mxu0 0
        %1037 = vmatpush1.bf16.msra.mxu0 0
        %1038 = vmatprep.subr.bf16.mxu0 0
        %1039 = vmatpush1.bf16.msra.mxu0 0
        %1040 = vmatprep.subr.bf16.mxu0 0
        %1041 = vmatpush1.bf16.msra.mxu0 0
        %1042 = vmatprep.subr.bf16.mxu0 0
        %1043 = vmatpush1.bf16.msra.mxu0 0
        %1044 = vmatprep.subr.bf16.mxu0 0
        %1045 = vmatpush1.bf16.msra.mxu0 0
        %1046 = vmatprep.subr.bf16.mxu0 0
        %1047 = vmatpush1.bf16.msra.mxu0 0
        %1048 = vmatprep.subr.bf16.mxu0 0
        %1049 = vmatpush1.bf16.msra.mxu0 0
        %1050 = vmatprep.subr.bf16.mxu0 0
        %1051 = vmatpush1.bf16.msra.mxu0 0
        %1052 = vmatprep.subr.bf16.mxu0 0
        %1053 = vmatpush1.bf16.msra.mxu0 0
        %1054 = vmatprep.subr.bf16.mxu0 0
        %1055 = vmatpush1.bf16.msra.mxu0 0
        %1056 = vmatprep.subr.bf16.mxu0 0
        %1057 = vmatpush1.bf16.msra.mxu0 0
        %1058 = vmatprep.subr.bf16.mxu0 0
        %1059 = vmatpush1.bf16.msra.mxu0 0
        %1060 = vmatprep.mubr.bf16.mxu0 0
        %1061 = vmatmul.mubr.bf16.gmra.mrb[0].mxu0 %v1023
        %v1062 = vpop.f32.mrb[0].mxu0
        %v1063 = vadd.f32 0.0, %v1062
        %v1064 = vpop.f32.mrb[0].mxu0
        %v1065 = vpop.f32.mrb[0].mxu0
        %v1066 = vadd.f32 0.0, %v1065
        %v1067 = vpop.f32.mrb[0].mxu0
        %1068 = vmatprep.mubr.bf16.mxu0 0
        %1069 = vmatmul.mubr.bf16.gmra.mrb[0].mxu0 %v1026
        %v1070 = vpop.f32.mrb[0].mxu0
        %v1071 = vadd.f32 0.0, %v1070
        %v1072 = vpop.f32.mrb[0].mxu0
        %v1073 = vpop.f32.mrb[0].mxu0
        %v1074 = vpop.f32.mrb[0].mxu0
        %1075 = vdwg.mxu0
        %1076 = vrot.lane.b32.xlu0 %v953, 112
        %v1077 = vpop.permute.xlu0 %1076
        %1078 = vrot.lane.b32.xlu0 %v954, 112
        %v1079 = vpop.permute.xlu0 %1078
        %1080 = vrot.lane.b32.xlu0 %v955, 112
        %v1081 = vpop.permute.xlu0 %1080
        %v1086 = vsel %vm776, %v949, 0
        %v1089 = vsel %vm776, %v950, 0
        %1091 = vmatprep.subr.bf16.mxu0 0
        %1092 = vmatpush1.bf16.msra.mxu0 %v1077
        %1093 = vmatprep.subr.bf16.mxu0 0
        %1094 = vmatpush1.bf16.msra.mxu0 %v1079
        %1095 = vmatprep.subr.bf16.mxu0 0
        %1096 = vmatpush1.bf16.msra.mxu0 %v1081
        %1097 = vmatprep.subr.bf16.mxu0 0
        %1098 = vmatpush1.bf16.msra.mxu0 0
        %1099 = vmatprep.subr.bf16.mxu0 0
        %1100 = vmatpush1.bf16.msra.mxu0 0
        %1101 = vmatprep.subr.bf16.mxu0 0
        %1102 = vmatpush1.bf16.msra.mxu0 0
        %1103 = vmatprep.subr.bf16.mxu0 0
        %1104 = vmatpush1.bf16.msra.mxu0 0
        %1105 = vmatprep.subr.bf16.mxu0 0
        %1106 = vmatpush1.bf16.msra.mxu0 0
        %1107 = vmatprep.subr.bf16.mxu0 0
        %1108 = vmatpush1.bf16.msra.mxu0 0
        %1109 = vmatprep.subr.bf16.mxu0 0
        %1110 = vmatpush1.bf16.msra.mxu0 0
        %1111 = vmatprep.subr.bf16.mxu0 0
        %1112 = vmatpush1.bf16.msra.mxu0 0
        %1113 = vmatprep.subr.bf16.mxu0 0
        %1114 = vmatpush1.bf16.msra.mxu0 0
        %1115 = vmatprep.subr.bf16.mxu0 0
        %1116 = vmatpush1.bf16.msra.mxu0 0
        %1117 = vmatprep.subr.bf16.mxu0 0
        %1118 = vmatpush1.bf16.msra.mxu0 0
        %1119 = vmatprep.subr.bf16.mxu0 0
        %1120 = vmatpush1.bf16.msra.mxu0 0
        %1121 = vmatprep.subr.bf16.mxu0 0
        %1122 = vmatpush1.bf16.msra.mxu0 0
        %1123 = vmatprep.mubr.bf16.mxu0 0
        %1124 = vmatmul.mubr.bf16.gmra.mrb[0].mxu0 %v1086
        %v1125 = vpop.f32.mrb[0].mxu0
        %v1126 = vadd.f32 0.0, %v1125
        %v1127 = vpop.f32.mrb[0].mxu0
        %v1128 = vpop.f32.mrb[0].mxu0
        %v1129 = vadd.f32 0.0, %v1128
        %v1130 = vpop.f32.mrb[0].mxu0
        %1131 = vmatprep.mubr.bf16.mxu0 0
        %1132 = vmatmul.mubr.bf16.gmra.mrb[0].mxu0 %v1089
        %v1133 = vpop.f32.mrb[0].mxu0
        %v1134 = vadd.f32 0.0, %v1133
        %v1135 = vpop.f32.mrb[0].mxu0
        %v1136 = vpop.f32.mrb[0].mxu0
        %v1137 = vpop.f32.mrb[0].mxu0
        %1138 = vdwg.mxu0
        %1139 = vrot.lane.b32.xlu0 %v953, 104
        %v1140 = vpop.permute.xlu0 %1139
        %1141 = vrot.lane.b32.xlu0 %v954, 104
        %v1142 = vpop.permute.xlu0 %1141
        %1143 = vrot.lane.b32.xlu0 %v955, 104
        %v1144 = vpop.permute.xlu0 %1143
        %v1149 = vsel %vm776, %v951, 0
        %v1152 = vsel %vm776, %v952, 0
        %1154 = vmatprep.subr.bf16.mxu0 0
        %1155 = vmatpush1.bf16.msra.mxu0 %v1140
        %1156 = vmatprep.subr.bf16.mxu0 0
        %1157 = vmatpush1.bf16.msra.mxu0 %v1142
        %1158 = vmatprep.subr.bf16.mxu0 0
        %1159 = vmatpush1.bf16.msra.mxu0 %v1144
        %1160 = vmatprep.subr.bf16.mxu0 0
        %1161 = vmatpush1.bf16.msra.mxu0 0
        %1162 = vmatprep.subr.bf16.mxu0 0
        %1163 = vmatpush1.bf16.msra.mxu0 0
        %1164 = vmatprep.subr.bf16.mxu0 0
        %1165 = vmatpush1.bf16.msra.mxu0 0
        %1166 = vmatprep.subr.bf16.mxu0 0
        %1167 = vmatpush1.bf16.msra.mxu0 0
        %1168 = vmatprep.subr.bf16.mxu0 0
        %1169 = vmatpush1.bf16.msra.mxu0 0
        %1170 = vmatprep.subr.bf16.mxu0 0
        %1171 = vmatpush1.bf16.msra.mxu0 0
        %1172 = vmatprep.subr.bf16.mxu0 0
        %1173 = vmatpush1.bf16.msra.mxu0 0
        %1174 = vmatprep.subr.bf16.mxu0 0
        %1175 = vmatpush1.bf16.msra.mxu0 0
        %1176 = vmatprep.subr.bf16.mxu0 0
        %1177 = vmatpush1.bf16.msra.mxu0 0
        %1178 = vmatprep.subr.bf16.mxu0 0
        %1179 = vmatpush1.bf16.msra.mxu0 0
        %1180 = vmatprep.subr.bf16.mxu0 0
        %1181 = vmatpush1.bf16.msra.mxu0 0
        %1182 = vmatprep.subr.bf16.mxu0 0
        %1183 = vmatpush1.bf16.msra.mxu0 0
        %1184 = vmatprep.subr.bf16.mxu0 0
        %1185 = vmatpush1.bf16.msra.mxu0 0
        %1186 = vmatprep.mubr.bf16.mxu0 0
        %1187 = vmatmul.mubr.bf16.gmra.mrb[0].mxu0 %v1149
        %v1188 = vpop.f32.mrb[0].mxu0
        %v1189 = vadd.f32 0.0, %v1188
        %v1190 = vpop.f32.mrb[0].mxu0
        %v1191 = vpop.f32.mrb[0].mxu0
        %v1192 = vadd.f32 0.0, %v1191
        %v1193 = vpop.f32.mrb[0].mxu0
        %1194 = vmatprep.mubr.bf16.mxu0 0
        %1195 = vmatmul.mubr.bf16.gmra.mrb[0].mxu0 %v1152
        %v1196 = vpop.f32.mrb[0].mxu0
        %v1197 = vadd.f32 0.0, %v1196
        %v1198 = vpop.f32.mrb[0].mxu0
        %v1199 = vpop.f32.mrb[0].mxu0
        %v1200 = vpop.f32.mrb[0].mxu0
        %1201 = vdwg.mxu0
        %1205 = vrot.lane.b32.xlu0 %v1063, 8
        %v1206 = vpop.permute.xlu0 %1205
        %1207 = vrot.lane.b32.xlu0 %v1066, 8
        %v1208 = vpop.permute.xlu0 %1207
        %1209 = vrot.lane.b32.xlu0 %v1071, 8
        %v1210 = vpop.permute.xlu0 %1209
        %1217 = vrot.lane.b32.xlu0 %v1126, 16
        %v1218 = vpop.permute.xlu0 %1217
        %1219 = vrot.lane.b32.xlu0 %v1129, 16
        %v1220 = vpop.permute.xlu0 %1219
        %1221 = vrot.lane.b32.xlu0 %v1134, 16
        %v1222 = vpop.permute.xlu0 %1221
        %1229 = vrot.lane.b32.xlu0 %v1189, 24
        %v1230 = vpop.permute.xlu0 %1229
        %1231 = vrot.lane.b32.xlu0 %v1192, 24
        %v1232 = vpop.permute.xlu0 %1231
        %1233 = vrot.lane.b32.xlu0 %v1197, 24
        %v1234 = vpop.permute.xlu0 %1233
        %vm1238 = vcmask 64512
        %v1239 = vsel %vm1238, %v997, %v1206
        %v1240 = vsel %vm1238, %v1000, %v1208
        %v1241 = vsel %vm1238, %v1005, %v1210
        %v1242 = vsel %vm385, %v1239, %v1218
        %v1243 = vsel %vm385, %v1240, %v1220
        %v1244 = vsel %vm385, %v1241, %v1222
        %vm1245 = vcmask 195584
        %v1246 = vsel %vm1245, %v1242, %v1230
        %v1247 = vsel %vm1245, %v1243, %v1232
        %v1248 = vsel %vm1245, %v1244, %v1234
        %v1249 = vld [vmem:[#allocation2] sm:$0xff]
        %v1250 = vld [vmem:[#allocation2 + $0x8] sm:$0xff]
        %v1251 = vld [vmem:[#allocation2 + $0x10] sm:$0xff]
        %v1252 = vadd.f32 %v1249, %v1246
        %v1253 = vadd.f32 %v1250, %v1247
        %v1254 = vadd.f32 %v1251, %v1248
        %vm1255 = vcmask 261120
        %1256 = vst.msk [vmem:[#allocation2] sm:$0xff] %vm1255, %v1252
        %1257 = vst.msk [vmem:[#allocation2 + $0x8] sm:$0xff] %vm1255, %v1253
        %1258 = vst.msk [vmem:[#allocation2 + $0x10] sm:$0xff] %vm1255, %v1254
        %p1259 = scmp.eq.s32.totalorder %s19, 2
        // Predicated region
        $region53: #{tpu_custom_call.1} parent=43 // pred_check
          %p1260 = pneg %p1259
        $region54: #{tpu_custom_call.1} parent=43 // pred_check_branch
          %1262 = sbr.rel (%p1260) target = $region56
        $region55: #{tpu_custom_call.1} parent=43 // pred_region
          %v1263 = vld [vmem:[#allocation2] sm:$0xff]
          %v1264 = vld [vmem:[#allocation2 + $0x8] sm:$0xff]
          %v1265 = vld [vmem:[#allocation2 + $0x10] sm:$0xff]
          %v1266 = vld [vmem:[%s4] sm:$0x1]
          %v1268 = vlaneseq
          %v1269 = vshrl.u32 %v1268, 7
          %v1270 = vsub.s32 0, %v1269
          %v1271 = vrot.slane %v1266, %v1270
          %v1273 = vmul.f32 %v1263, %v1271
          %v1274 = vmul.f32 %v1264, %v1271
          %v1275 = vmul.f32 %v1265, %v1271
          %v1276 = vld [vmem:[%s5] sm:$0x1]
          %v1278 = vlaneseq
          %v1279 = vshrl.u32 %v1278, 7
          %v1280 = vsub.s32 0, %v1279
          %v1281 = vrot.slane %v1276, %v1280
          %v1283 = vadd.f32 %v1273, %v1281
          %v1284 = vadd.f32 %v1274, %v1281
          %v1285 = vadd.f32 %v1275, %v1281
          %vm1286 = vcmp.gt.f32.partialorder %v1283, 0.0
          %vm1287 = vcmp.gt.f32.partialorder %v1284, 0.0
          %vm1288 = vcmp.gt.f32.partialorder %v1285, 0.0
          %v1289 = vmin.f32 %v1283, 0.0
          %v1290 = vmin.f32 %v1284, 0.0
          %v1291 = vmin.f32 %v1285, 0.0
          %v1292 = vmul.f32 %v1289, 1.442695
          %v1293 = vpow.pop %v1292
          %v1294 = vmul.f32 %v1290, 1.442695
          %v1295 = vpow.pop %v1294
          %v1296 = vmul.f32 %v1291, 1.442695
          %v1297 = vpow.pop %v1296
          %v1298 = vsub.f32 %v1293, 1.0
          %v1299 = vsub.f32 %v1295, 1.0
          %v1300 = vsub.f32 %v1297, 1.0
          %v1301 = vsel %vm1286, %v1283, %v1298
          %v1302 = vsel %vm1287, %v1284, %v1299
          %v1303 = vsel %vm1288, %v1285, %v1300
          %1304 = vst.msk [vmem:[#allocation6] sm:$0xff] %vm1255, %v1301
          %1305 = vst.msk [vmem:[#allocation6 + $0x8] sm:$0xff] %vm1255, %v1302
          %1306 = vst.msk [vmem:[#allocation6 + $0x10] sm:$0xff] %vm1255, %v1303
        $region56: #{tpu_custom_call.1} parent=43 // pred_fallthru
          _
        // Predicated region
        $region57: #{tpu_custom_call.1} parent=43 // pred_check
          %p1307 = pneg %p168
        $region58: #{tpu_custom_call.1} parent=43 // pred_check_branch
          %1309 = sbr.rel (%p1307) target = $region60
        $region59: #{tpu_custom_call.1} parent=43 // pred_region
          %s1311 = ssub.s32 384, 384
          %1312 = vsyncadd [#allocation5], %s1311
          %s1313 = sshll.u32 [#allocation6], 4
          %s1314 = int_to_ptr.vmem [resolvable:$true] %s1313
          %1319 = dma.vmem_to_hbm [thread:$0]  %s1314, 384, %s6, [#allocation5], 128, 128, 8
        $region60: #{tpu_custom_call.1} parent=43 // pred_fallthru
          _
        // Predicated region
        $region61: #{tpu_custom_call.1} parent=43 // pred_check
          %p1320 = pneg %p168
        $region62: #{tpu_custom_call.1} parent=43 // pred_check_branch
          %1322 = sbr.rel (%p1320) target = $region64
        $region63: #{tpu_custom_call.1} parent=43 // pred_region
          %1323 = dma.done [#allocation5], 384
        $region64: #{tpu_custom_call.1} parent=43 // pred_fallthru
          _
      $region44: #{tpu_custom_call.1} parent=5 // pred_fallthru
        _
      %p1324 = scmp.le.s32.totalorder 2, %s14
      // Predicated region
      $region65: #{tpu_custom_call.1} parent=5 // pred_check
        %p1325 = pneg %p1324
      $region66: #{tpu_custom_call.1} parent=5 // pred_check_branch
        %1327 = sbr.rel (%p1325) target = $region68
      $region67: #{tpu_custom_call.1} parent=5 // pred_region
        %s1328 = ssub.s32 %s14, 2
      $region68: #{tpu_custom_call.1} parent=5 // pred_fallthru
        _
    $region6: #{tpu_custom_call.1} parent=1 // loop_footer
      %s18 = sadd.s32 1, %s14
    $region7: #{tpu_custom_call.1} parent=1 // loop_footer_branch
      %13 = sbr.rel target = $region3
    $region8: #{tpu_custom_call.1} parent=1 // loop_exit
      _
    %1329 = vsyncpa [#allocation4], 1
    %s1330 = scalar_lea.sflag [#allocation4], 1
    %1331 = vsyncpa %s1330, 1
    %1332 = vsyncpa [#allocation5], 1
    %s1333 = scalar_lea.sflag [#allocation5], 1
    %1334 = vsyncpa %s1333, 1

</llo_original>
